<compile_context>
chip_gen: v7x
topology: tpu7x:2x2x1
jax: 0.10.0
libtpu: 0.0.40
codegen_flags: <defaults>
</compile_context>

<pallas_src>
import functools

import numpy as np
import jax
import jax.numpy as jnp
from jax import lax
from jax.experimental import pallas as pl
from jax.experimental.pallas import tpu as pltpu


# ------------------------------ kernel helpers -------------------------------

def _leaky(x):
    return jnp.where(x >= 0, x, 0.2 * x)            # LeakyReLU(0.2)


def _conv_layer(acts, selh_ref, rhs_ref, ho):
    """4x4 / stride-2 / pad-1 conv over per-batch activations.

    acts    : list of per-batch (H_in, W_in*C_in) f32 values (lanes = (w, c)).
    selh_ref: (4*ho, H_in) 0/1 row selector; all-zero rows realise padding.
    rhs_ref : (4*W_in*C_in, Wo*C_out) conv weights, banded layout.
    Returns   (N*ho, Wo*C_out).
    """
    cols_rows = []
    for a in acts:
        # tap-row gather: one matmul per batch (K = H_in <= 16, exact 0/1)
        r = jnp.dot(selh_ref[...], a, preferred_element_type=jnp.float32)
        # regroup the 4 tap row-blocks into the lane (K) dimension so the
        # whole conv contraction is ONE K = 4*W_in*C_in matmul.
        cols = jnp.concatenate([r[t * ho:(t + 1) * ho, :] for t in range(4)],
                               axis=1)               # (ho, 4*W_in*C_in)
        cols_rows.append(cols)
    cols_all = (cols_rows[0] if len(cols_rows) == 1
                else jnp.concatenate(cols_rows, axis=0))
    return jnp.dot(cols_all, rhs_ref[...], preferred_element_type=jnp.float32)


def _bn_leaky(z, gamma_ref, beta_ref, cout, wo, eps):
    """Training-mode BatchNorm2d (batch stats, biased var) + LeakyReLU(0.2).

    z: (N*Ho, Wo*Cout) with lane order (ow, c)."""
    cnt = z.shape[0] * wo
    s = z[:, 0:cout]
    for w in range(1, wo):                           # pool the ow lane-blocks
        s = s + z[:, w * cout:(w + 1) * cout]
    mean_c = jnp.sum(s, axis=0, keepdims=True) * (1.0 / cnt)        # (1, Cout)
    mean_t = (mean_c if wo == 1
              else jnp.concatenate([mean_c] * wo, axis=1))
    d = z - mean_t
    d2 = d * d
    s2 = d2[:, 0:cout]
    for w in range(1, wo):
        s2 = s2 + d2[:, w * cout:(w + 1) * cout]
    var_c = jnp.sum(s2, axis=0, keepdims=True) * (1.0 / cnt)
    var_t = (var_c if wo == 1
             else jnp.concatenate([var_c] * wo, axis=1))
    y = d * lax.rsqrt(var_t + eps) * gamma_ref[...] + beta_ref[...]
    return _leaky(y)


def _encoder_kernel(*refs, layers, n, eps):
    out_ref = refs[-1]
    x_ref = refs[0]
    idx = 1

    # split the (N*H, W*C) input into per-batch 2-D views
    h0 = layers[0][2]
    acts = [x_ref[b * h0:(b + 1) * h0, :] for b in range(n)]

    for (_cin, cout, hin, win, has_bn) in layers:
        ho, wo = hin // 2, win // 2
        selh_ref, rhs_ref = refs[idx], refs[idx + 1]
        idx += 2
        z = _conv_layer(acts, selh_ref, rhs_ref, ho)     # (N*ho, wo*cout)
        if has_bn:
            gamma_ref, beta_ref = refs[idx], refs[idx + 1]
            idx += 2
            z = _bn_leaky(z, gamma_ref, beta_ref, cout, wo, eps)
        else:
            z = _leaky(z)
        acts = [z[b * ho:(b + 1) * ho, :] for b in range(n)]

    # Flatten (lane order (h, w, c); the Linear weight is pre-permuted to
    # match torch's NCHW Flatten(1)) + Linear.
    wl_ref, bl_ref = refs[idx], refs[idx + 1]
    r = layers[-1][2] // 2
    flat_rows = []
    for a in acts:                                       # (r, r*c_last)
        if r == 1:
            flat_rows.append(a)
        else:
            flat_rows.append(jnp.concatenate([a[h:h + 1, :] for h in range(r)],
                                             axis=1))
    flat = flat_rows[0] if n == 1 else jnp.concatenate(flat_rows, axis=0)
    out_ref[...] = (jnp.dot(flat, wl_ref[...],
                            preferred_element_type=jnp.float32) + bl_ref[...])


# ----------------- trace-time constant selector / weight layout --------------

def _build_selh(ho, hin):
    """(4*ho, hin) 0/1 matrix: tap-t block selects input row ih = 2*oh + t - 1;
    out-of-range rows stay all-zero (that is the conv zero padding)."""
    s = np.zeros((4 * ho, hin), np.float32)
    for t in range(4):
        for oh in range(ho):
            ih = 2 * oh + t - 1
            if 0 <= ih < hin:
                s[t * ho + oh, ih] = 1.0
    return s


def _build_w_placement(win, wo):
    """(win, wo, 4) 0/1: placement[iw, ow, j] = [iw == 2*ow + j - 1]."""
    p = np.zeros((win, wo, 4), np.float32)
    for ow in range(wo):
        for j in range(4):
            iw = 2 * ow + j - 1
            if 0 <= iw < win:
                p[iw, ow, j] = 1.0
    return p


# ------------------------------ forward pass ---------------------------------

def encoder_forward(params, x_nchw, eps=1e-5):
    n, nc, h, w = x_nchw.shape
    # raw image streamed once, rows = (b, h), lanes = (w, c)
    x2d = (jnp.transpose(x_nchw, (0, 2, 3, 1))
           .reshape(n * h, w * nc).astype(jnp.float32))

    conv_ws = [params["conv0_w"]] + [s["w"] for s in params["shrink"]]
    layers, args = [], [x2d]
    hin, win = h, w
    for li, wconv in enumerate(conv_ws):
        cout, cin, kh, kw = wconv.shape
        assert (kh, kw) == (4, 4)
        ho, wo = hin // 2, win // 2
        selh = jnp.asarray(_build_selh(ho, hin))
        placement = jnp.asarray(_build_w_placement(win, wo))
        # banded weight: rhs[(t, iw, ci), (ow, co)] = W[co, ci, t, iw - 2ow + 1]
        rhs = jnp.einsum("woj,ciaj->awioc", placement,
                         wconv.astype(jnp.float32)
                         ).reshape(kh * win * cin, wo * cout)
        args += [selh, rhs]
        has_bn = li > 0
        layers.append((int(cin), int(cout), hin, win, has_bn))
        if has_bn:
            s = params["shrink"][li - 1]
            args += [jnp.tile(s["gamma"].astype(jnp.float32),
                              wo).reshape(1, wo * cout),
                     jnp.tile(s["beta"].astype(jnp.float32),
                              wo).reshape(1, wo * cout)]
        hin, win = ho, wo

    nz, lin_in = params["lin_w"].shape
    c_last = int(conv_ws[-1].shape[0])
    r = hin
    assert hin == win and c_last * r * r == lin_in
    # permute Linear input dim from torch's (c, h, w) order to our (h, w, c)
    wl = jnp.transpose(params["lin_w"].reshape(nz, c_last, r, r),
                       (2, 3, 1, 0)).reshape(r * r * c_last, nz)
    args += [wl.astype(jnp.float32),
             params["lin_b"].reshape(1, nz).astype(jnp.float32)]

    kernel = functools.partial(_encoder_kernel, layers=tuple(layers),
                               n=n, eps=eps)
    return pl.pallas_call(
        kernel,
        out_shape=jax.ShapeDtypeStruct((n, nz), jnp.float32),
        in_specs=[pl.BlockSpec(memory_space=pltpu.MemorySpace.VMEM)
                  for _ in args],
        out_specs=pl.BlockSpec(memory_space=pltpu.MemorySpace.VMEM),
    )(*args)


# ----------------------- params (synthetic) & reference ----------------------

def init_params(key, nc=3, ndf=8, nz=16, img_size=16):
    keys = iter(jax.random.split(key, 16))

    def w(shape, scale=0.08):
        return scale * jax.random.normal(next(keys), shape, jnp.float32)

    p = {"conv0_w": w((ndf, nc, 4, 4)), "shrink": []}
    for step in range(3):
        cin, cout = ndf * 2 ** step, ndf * 2 ** (step + 1)
        p["shrink"].append(dict(w=w((cout, cin, 4, 4)),
                                gamma=jnp.ones((cout,), jnp.float32),
                                beta=jnp.zeros((cout,), jnp.float32)))
    r = img_size // 16
    p["lin_w"] = w((nz, ndf * 8 * r * r))
    p["lin_b"] = w((nz,))
    return p


def reference_encoder(params, x_nchw, eps=1e-5):
    """Pure-JAX reference (lax.conv) used only to sanity-check the kernel."""
    def conv(x, w):
        return lax.conv_general_dilated(
            x, w, window_strides=(2, 2), padding=((1, 1), (1, 1)),
            dimension_numbers=("NCHW", "OIHW", "NCHW"),
            precision=lax.Precision.HIGHEST)

    y = conv(x_nchw, params["conv0_w"])
    y = jnp.where(y >= 0, y, 0.2 * y)
    for s in params["shrink"]:
        y = conv(y, s["w"])
        mean = jnp.mean(y, axis=(0, 2, 3), keepdims=True)
        var = jnp.mean(jnp.square(y - mean), axis=(0, 2, 3), keepdims=True)
        y = ((y - mean) * lax.rsqrt(var + eps)
             * s["gamma"].reshape(1, -1, 1, 1) + s["beta"].reshape(1, -1, 1, 1))
        y = jnp.where(y >= 0, y, 0.2 * y)
    flat = y.reshape(y.shape[0], -1)
    return (jnp.dot(flat, params["lin_w"].T, precision=lax.Precision.HIGHEST)
            + params["lin_b"])


# ---------------------------------- main --------------------------------------

if __name__ == "__main__":
    # Encoder(ndf=8, nc=3, nz=16, img_size=16), batch=2.
    NC, NDF, NZ, IMG, BATCH = 3, 8, 16, 16, 2
    key = jax.random.PRNGKey(0)
    pkey, xkey = jax.random.split(key)
    params = init_params(pkey, nc=NC, ndf=NDF, nz=NZ, img_size=IMG)
    x = jax.random.normal(xkey, (BATCH, NC, IMG, IMG), jnp.float32)

    out = jax.block_until_ready(jax.jit(encoder_forward)(params, x))
    assert out.shape == (BATCH, NZ), out.shape
    assert bool(jnp.all(jnp.isfinite(out)))

    # Cross-check the fused kernel against a pure-JAX reference.
    ref = jax.block_until_ready(jax.jit(reference_encoder)(params, x))
    np.testing.assert_allclose(np.asarray(out), np.asarray(ref),
                               rtol=5e-3, atol=5e-3)
    # TODO(synk): ShapePrinter debug prints and BatchNorm running-stat buffer
    # updates are training/debug side effects with no effect on the output.
    print("KERNEL_OK")
</pallas_src>

<mosaic_0001>
module attributes {stable_mosaic.version = 11 : i64} {
  func.func @_encoder_kernel(%arg0: memref<32x48xf32, #tpu.memory_space<vmem>>, %arg1: memref<32x16xf32, #tpu.memory_space<vmem>>, %arg2: memref<192x64xf32, #tpu.memory_space<vmem>>, %arg3: memref<16x8xf32, #tpu.memory_space<vmem>>, %arg4: memref<256x64xf32, #tpu.memory_space<vmem>>, %arg5: memref<1x64xf32, #tpu.memory_space<vmem>>, %arg6: memref<1x64xf32, #tpu.memory_space<vmem>>, %arg7: memref<8x4xf32, #tpu.memory_space<vmem>>, %arg8: memref<256x64xf32, #tpu.memory_space<vmem>>, %arg9: memref<1x64xf32, #tpu.memory_space<vmem>>, %arg10: memref<1x64xf32, #tpu.memory_space<vmem>>, %arg11: memref<4x2xf32, #tpu.memory_space<vmem>>, %arg12: memref<256x64xf32, #tpu.memory_space<vmem>>, %arg13: memref<1x64xf32, #tpu.memory_space<vmem>>, %arg14: memref<1x64xf32, #tpu.memory_space<vmem>>, %arg15: memref<64x16xf32, #tpu.memory_space<vmem>>, %arg16: memref<1x16xf32, #tpu.memory_space<vmem>>, %arg17: memref<2x16xf32, #tpu.memory_space<vmem>>) attributes {dimension_semantics = [], scalar_prefetch = 0 : i64, scratch_operands = 0 : i64, tpu.core_type = #tpu.core_type<tc>} {
    %c0 = arith.constant 0 : index
    %c0_0 = arith.constant 0 : index
    %0 = vector.load %arg0[%c0, %c0_0] : memref<32x48xf32, #tpu.memory_space<vmem>>, vector<16x48xf32>
    %c16 = arith.constant 16 : index
    %c0_1 = arith.constant 0 : index
    %1 = vector.load %arg0[%c16, %c0_1] : memref<32x48xf32, #tpu.memory_space<vmem>>, vector<16x48xf32>
    %c0_2 = arith.constant 0 : index
    %c0_3 = arith.constant 0 : index
    %2 = vector.load %arg1[%c0_2, %c0_3] : memref<32x16xf32, #tpu.memory_space<vmem>>, vector<32x16xf32>
    %cst = arith.constant dense<0.000000e+00> : vector<32x48xf32>
    %3 = tpu.matmul %2, %0, %cst {dimension_numbers = #tpu.dot_dimension_numbers<[1], [0], [0], [1], [0, 0, 1, 1], [], []>} : vector<32x16xf32>, vector<16x48xf32>, vector<32x48xf32> -> vector<32x48xf32>
    %4 = vector.extract_strided_slice %3 {offsets = [0, 0], sizes = [8, 48], strides = [1, 1]} : vector<32x48xf32> to vector<8x48xf32>
    %5 = vector.extract_strided_slice %3 {offsets = [8, 0], sizes = [8, 48], strides = [1, 1]} : vector<32x48xf32> to vector<8x48xf32>
    %6 = vector.extract_strided_slice %3 {offsets = [16, 0], sizes = [8, 48], strides = [1, 1]} : vector<32x48xf32> to vector<8x48xf32>
    %7 = vector.extract_strided_slice %3 {offsets = [24, 0], sizes = [8, 48], strides = [1, 1]} : vector<32x48xf32> to vector<8x48xf32>
    %8 = tpu.concatenate %4, %5, %6, %7 in 1 : vector<8x48xf32>, vector<8x48xf32>, vector<8x48xf32>, vector<8x48xf32> -> vector<8x192xf32>
    %c0_4 = arith.constant 0 : index
    %c0_5 = arith.constant 0 : index
    %9 = vector.load %arg1[%c0_4, %c0_5] : memref<32x16xf32, #tpu.memory_space<vmem>>, vector<32x16xf32>
    %cst_6 = arith.constant dense<0.000000e+00> : vector<32x48xf32>
    %10 = tpu.matmul %9, %1, %cst_6 {dimension_numbers = #tpu.dot_dimension_numbers<[1], [0], [0], [1], [0, 0, 1, 1], [], []>} : vector<32x16xf32>, vector<16x48xf32>, vector<32x48xf32> -> vector<32x48xf32>
    %11 = vector.extract_strided_slice %10 {offsets = [0, 0], sizes = [8, 48], strides = [1, 1]} : vector<32x48xf32> to vector<8x48xf32>
    %12 = vector.extract_strided_slice %10 {offsets = [8, 0], sizes = [8, 48], strides = [1, 1]} : vector<32x48xf32> to vector<8x48xf32>
    %13 = vector.extract_strided_slice %10 {offsets = [16, 0], sizes = [8, 48], strides = [1, 1]} : vector<32x48xf32> to vector<8x48xf32>
    %14 = vector.extract_strided_slice %10 {offsets = [24, 0], sizes = [8, 48], strides = [1, 1]} : vector<32x48xf32> to vector<8x48xf32>
    %15 = tpu.concatenate %11, %12, %13, %14 in 1 : vector<8x48xf32>, vector<8x48xf32>, vector<8x48xf32>, vector<8x48xf32> -> vector<8x192xf32>
    %16 = tpu.concatenate %8, %15 in 0 : vector<8x192xf32>, vector<8x192xf32> -> vector<16x192xf32>
    %c0_7 = arith.constant 0 : index
    %c0_8 = arith.constant 0 : index
    %17 = vector.load %arg2[%c0_7, %c0_8] : memref<192x64xf32, #tpu.memory_space<vmem>>, vector<192x64xf32>
    %cst_9 = arith.constant dense<0.000000e+00> : vector<16x64xf32>
    %18 = tpu.matmul %16, %17, %cst_9 {dimension_numbers = #tpu.dot_dimension_numbers<[1], [0], [0], [1], [0, 0, 1, 1], [], []>} : vector<16x192xf32>, vector<192x64xf32>, vector<16x64xf32> -> vector<16x64xf32>
    %cst_10 = arith.constant 0.000000e+00 : f32
    %19 = vector.broadcast %cst_10 : f32 to vector<16x64xf32>
    %20 = arith.cmpf oge, %18, %19 : vector<16x64xf32>
    %cst_11 = arith.constant 2.000000e-01 : f32
    %21 = vector.broadcast %cst_11 : f32 to vector<16x64xf32>
    %22 = arith.mulf %21, %18 : vector<16x64xf32>
    %23 = arith.select %20, %18, %22 : vector<16x64xi1>, vector<16x64xf32>
    %24 = vector.extract_strided_slice %23 {offsets = [0, 0], sizes = [8, 64], strides = [1, 1]} : vector<16x64xf32> to vector<8x64xf32>
    %25 = vector.extract_strided_slice %23 {offsets = [8, 0], sizes = [8, 64], strides = [1, 1]} : vector<16x64xf32> to vector<8x64xf32>
    %c0_12 = arith.constant 0 : index
    %c0_13 = arith.constant 0 : index
    %26 = vector.load %arg3[%c0_12, %c0_13] : memref<16x8xf32, #tpu.memory_space<vmem>>, vector<16x8xf32>
    %cst_14 = arith.constant dense<0.000000e+00> : vector<16x64xf32>
    %27 = tpu.matmul %26, %24, %cst_14 {dimension_numbers = #tpu.dot_dimension_numbers<[1], [0], [0], [1], [0, 0, 1, 1], [], []>} : vector<16x8xf32>, vector<8x64xf32>, vector<16x64xf32> -> vector<16x64xf32>
    %28 = vector.extract_strided_slice %27 {offsets = [0, 0], sizes = [4, 64], strides = [1, 1]} : vector<16x64xf32> to vector<4x64xf32>
    %29 = vector.extract_strided_slice %27 {offsets = [4, 0], sizes = [4, 64], strides = [1, 1]} : vector<16x64xf32> to vector<4x64xf32>
    %30 = vector.extract_strided_slice %27 {offsets = [8, 0], sizes = [4, 64], strides = [1, 1]} : vector<16x64xf32> to vector<4x64xf32>
    %31 = vector.extract_strided_slice %27 {offsets = [12, 0], sizes = [4, 64], strides = [1, 1]} : vector<16x64xf32> to vector<4x64xf32>
    %32 = tpu.concatenate %28, %29, %30, %31 in 1 : vector<4x64xf32>, vector<4x64xf32>, vector<4x64xf32>, vector<4x64xf32> -> vector<4x256xf32>
    %c0_15 = arith.constant 0 : index
    %c0_16 = arith.constant 0 : index
    %33 = vector.load %arg3[%c0_15, %c0_16] : memref<16x8xf32, #tpu.memory_space<vmem>>, vector<16x8xf32>
    %cst_17 = arith.constant dense<0.000000e+00> : vector<16x64xf32>
    %34 = tpu.matmul %33, %25, %cst_17 {dimension_numbers = #tpu.dot_dimension_numbers<[1], [0], [0], [1], [0, 0, 1, 1], [], []>} : vector<16x8xf32>, vector<8x64xf32>, vector<16x64xf32> -> vector<16x64xf32>
    %35 = vector.extract_strided_slice %34 {offsets = [0, 0], sizes = [4, 64], strides = [1, 1]} : vector<16x64xf32> to vector<4x64xf32>
    %36 = vector.extract_strided_slice %34 {offsets = [4, 0], sizes = [4, 64], strides = [1, 1]} : vector<16x64xf32> to vector<4x64xf32>
    %37 = vector.extract_strided_slice %34 {offsets = [8, 0], sizes = [4, 64], strides = [1, 1]} : vector<16x64xf32> to vector<4x64xf32>
    %38 = vector.extract_strided_slice %34 {offsets = [12, 0], sizes = [4, 64], strides = [1, 1]} : vector<16x64xf32> to vector<4x64xf32>
    %39 = tpu.concatenate %35, %36, %37, %38 in 1 : vector<4x64xf32>, vector<4x64xf32>, vector<4x64xf32>, vector<4x64xf32> -> vector<4x256xf32>
    %40 = tpu.concatenate %32, %39 in 0 : vector<4x256xf32>, vector<4x256xf32> -> vector<8x256xf32>
    %c0_18 = arith.constant 0 : index
    %c0_19 = arith.constant 0 : index
    %41 = vector.load %arg4[%c0_18, %c0_19] : memref<256x64xf32, #tpu.memory_space<vmem>>, vector<256x64xf32>
    %cst_20 = arith.constant dense<0.000000e+00> : vector<8x64xf32>
    %42 = tpu.matmul %40, %41, %cst_20 {dimension_numbers = #tpu.dot_dimension_numbers<[1], [0], [0], [1], [0, 0, 1, 1], [], []>} : vector<8x256xf32>, vector<256x64xf32>, vector<8x64xf32> -> vector<8x64xf32>
    %43 = vector.extract_strided_slice %42 {offsets = [0, 0], sizes = [8, 16], strides = [1, 1]} : vector<8x64xf32> to vector<8x16xf32>
    %44 = vector.extract_strided_slice %42 {offsets = [0, 16], sizes = [8, 16], strides = [1, 1]} : vector<8x64xf32> to vector<8x16xf32>
    %45 = arith.addf %43, %44 : vector<8x16xf32>
    %46 = vector.extract_strided_slice %42 {offsets = [0, 32], sizes = [8, 16], strides = [1, 1]} : vector<8x64xf32> to vector<8x16xf32>
    %47 = arith.addf %45, %46 : vector<8x16xf32>
    %48 = vector.extract_strided_slice %42 {offsets = [0, 48], sizes = [8, 16], strides = [1, 1]} : vector<8x64xf32> to vector<8x16xf32>
    %49 = arith.addf %47, %48 : vector<8x16xf32>
    %cst_21 = arith.constant dense<0.000000e+00> : vector<16xf32>
    %50 = vector.multi_reduction <add>, %49, %cst_21 [0] : vector<8x16xf32> to vector<16xf32>
    %51 = vector.shape_cast %50 : vector<16xf32> to vector<1x16xf32>
    %cst_22 = arith.constant 3.125000e-02 : f32
    %52 = vector.broadcast %cst_22 : f32 to vector<1x16xf32>
    %53 = arith.mulf %51, %52 : vector<1x16xf32>
    %54 = tpu.concatenate %53, %53, %53, %53 in 1 : vector<1x16xf32>, vector<1x16xf32>, vector<1x16xf32>, vector<1x16xf32> -> vector<1x64xf32>
    %55 = vector.broadcast %54 : vector<1x64xf32> to vector<8x64xf32>
    %56 = arith.subf %42, %55 : vector<8x64xf32>
    %57 = arith.mulf %56, %56 : vector<8x64xf32>
    %58 = vector.extract_strided_slice %57 {offsets = [0, 0], sizes = [8, 16], strides = [1, 1]} : vector<8x64xf32> to vector<8x16xf32>
    %59 = vector.extract_strided_slice %57 {offsets = [0, 16], sizes = [8, 16], strides = [1, 1]} : vector<8x64xf32> to vector<8x16xf32>
    %60 = arith.addf %58, %59 : vector<8x16xf32>
    %61 = vector.extract_strided_slice %57 {offsets = [0, 32], sizes = [8, 16], strides = [1, 1]} : vector<8x64xf32> to vector<8x16xf32>
    %62 = arith.addf %60, %61 : vector<8x16xf32>
    %63 = vector.extract_strided_slice %57 {offsets = [0, 48], sizes = [8, 16], strides = [1, 1]} : vector<8x64xf32> to vector<8x16xf32>
    %64 = arith.addf %62, %63 : vector<8x16xf32>
    %cst_23 = arith.constant dense<0.000000e+00> : vector<16xf32>
    %65 = vector.multi_reduction <add>, %64, %cst_23 [0] : vector<8x16xf32> to vector<16xf32>
    %66 = vector.shape_cast %65 : vector<16xf32> to vector<1x16xf32>
    %cst_24 = arith.constant 3.125000e-02 : f32
    %67 = vector.broadcast %cst_24 : f32 to vector<1x16xf32>
    %68 = arith.mulf %66, %67 : vector<1x16xf32>
    %69 = tpu.concatenate %68, %68, %68, %68 in 1 : vector<1x16xf32>, vector<1x16xf32>, vector<1x16xf32>, vector<1x16xf32> -> vector<1x64xf32>
    %cst_25 = arith.constant 9.99999974E-6 : f32
    %70 = vector.broadcast %cst_25 : f32 to vector<1x64xf32>
    %71 = arith.addf %69, %70 : vector<1x64xf32>
    %72 = math.rsqrt %71 : vector<1x64xf32>
    %73 = vector.broadcast %72 : vector<1x64xf32> to vector<8x64xf32>
    %74 = arith.mulf %56, %73 : vector<8x64xf32>
    %c0_26 = arith.constant 0 : index
    %c0_27 = arith.constant 0 : index
    %75 = vector.load %arg5[%c0_26, %c0_27] : memref<1x64xf32, #tpu.memory_space<vmem>>, vector<1x64xf32>
    %76 = vector.broadcast %75 : vector<1x64xf32> to vector<8x64xf32>
    %77 = arith.mulf %74, %76 : vector<8x64xf32>
    %c0_28 = arith.constant 0 : index
    %c0_29 = arith.constant 0 : index
    %78 = vector.load %arg6[%c0_28, %c0_29] : memref<1x64xf32, #tpu.memory_space<vmem>>, vector<1x64xf32>
    %79 = vector.broadcast %78 : vector<1x64xf32> to vector<8x64xf32>
    %80 = arith.addf %77, %79 : vector<8x64xf32>
    %cst_30 = arith.constant 0.000000e+00 : f32
    %81 = vector.broadcast %cst_30 : f32 to vector<8x64xf32>
    %82 = arith.cmpf oge, %80, %81 : vector<8x64xf32>
    %cst_31 = arith.constant 2.000000e-01 : f32
    %83 = vector.broadcast %cst_31 : f32 to vector<8x64xf32>
    %84 = arith.mulf %83, %80 : vector<8x64xf32>
    %85 = arith.select %82, %80, %84 : vector<8x64xi1>, vector<8x64xf32>
    %86 = vector.extract_strided_slice %85 {offsets = [0, 0], sizes = [4, 64], strides = [1, 1]} : vector<8x64xf32> to vector<4x64xf32>
    %87 = vector.extract_strided_slice %85 {offsets = [4, 0], sizes = [4, 64], strides = [1, 1]} : vector<8x64xf32> to vector<4x64xf32>
    %c0_32 = arith.constant 0 : index
    %c0_33 = arith.constant 0 : index
    %88 = vector.load %arg7[%c0_32, %c0_33] : memref<8x4xf32, #tpu.memory_space<vmem>>, vector<8x4xf32>
    %cst_34 = arith.constant dense<0.000000e+00> : vector<8x64xf32>
    %89 = tpu.matmul %88, %86, %cst_34 {dimension_numbers = #tpu.dot_dimension_numbers<[1], [0], [0], [1], [0, 0, 1, 1], [], []>} : vector<8x4xf32>, vector<4x64xf32>, vector<8x64xf32> -> vector<8x64xf32>
    %90 = vector.extract_strided_slice %89 {offsets = [0, 0], sizes = [2, 64], strides = [1, 1]} : vector<8x64xf32> to vector<2x64xf32>
    %91 = vector.extract_strided_slice %89 {offsets = [2, 0], sizes = [2, 64], strides = [1, 1]} : vector<8x64xf32> to vector<2x64xf32>
    %92 = vector.extract_strided_slice %89 {offsets = [4, 0], sizes = [2, 64], strides = [1, 1]} : vector<8x64xf32> to vector<2x64xf32>
    %93 = vector.extract_strided_slice %89 {offsets = [6, 0], sizes = [2, 64], strides = [1, 1]} : vector<8x64xf32> to vector<2x64xf32>
    %94 = tpu.concatenate %90, %91, %92, %93 in 1 : vector<2x64xf32>, vector<2x64xf32>, vector<2x64xf32>, vector<2x64xf32> -> vector<2x256xf32>
    %c0_35 = arith.constant 0 : index
    %c0_36 = arith.constant 0 : index
    %95 = vector.load %arg7[%c0_35, %c0_36] : memref<8x4xf32, #tpu.memory_space<vmem>>, vector<8x4xf32>
    %cst_37 = arith.constant dense<0.000000e+00> : vector<8x64xf32>
    %96 = tpu.matmul %95, %87, %cst_37 {dimension_numbers = #tpu.dot_dimension_numbers<[1], [0], [0], [1], [0, 0, 1, 1], [], []>} : vector<8x4xf32>, vector<4x64xf32>, vector<8x64xf32> -> vector<8x64xf32>
    %97 = vector.extract_strided_slice %96 {offsets = [0, 0], sizes = [2, 64], strides = [1, 1]} : vector<8x64xf32> to vector<2x64xf32>
    %98 = vector.extract_strided_slice %96 {offsets = [2, 0], sizes = [2, 64], strides = [1, 1]} : vector<8x64xf32> to vector<2x64xf32>
    %99 = vector.extract_strided_slice %96 {offsets = [4, 0], sizes = [2, 64], strides = [1, 1]} : vector<8x64xf32> to vector<2x64xf32>
    %100 = vector.extract_strided_slice %96 {offsets = [6, 0], sizes = [2, 64], strides = [1, 1]} : vector<8x64xf32> to vector<2x64xf32>
    %101 = tpu.concatenate %97, %98, %99, %100 in 1 : vector<2x64xf32>, vector<2x64xf32>, vector<2x64xf32>, vector<2x64xf32> -> vector<2x256xf32>
    %102 = tpu.concatenate %94, %101 in 0 : vector<2x256xf32>, vector<2x256xf32> -> vector<4x256xf32>
    %c0_38 = arith.constant 0 : index
    %c0_39 = arith.constant 0 : index
    %103 = vector.load %arg8[%c0_38, %c0_39] : memref<256x64xf32, #tpu.memory_space<vmem>>, vector<256x64xf32>
    %cst_40 = arith.constant dense<0.000000e+00> : vector<4x64xf32>
    %104 = tpu.matmul %102, %103, %cst_40 {dimension_numbers = #tpu.dot_dimension_numbers<[1], [0], [0], [1], [0, 0, 1, 1], [], []>} : vector<4x256xf32>, vector<256x64xf32>, vector<4x64xf32> -> vector<4x64xf32>
    %105 = vector.extract_strided_slice %104 {offsets = [0, 0], sizes = [4, 32], strides = [1, 1]} : vector<4x64xf32> to vector<4x32xf32>
    %106 = vector.extract_strided_slice %104 {offsets = [0, 32], sizes = [4, 32], strides = [1, 1]} : vector<4x64xf32> to vector<4x32xf32>
    %107 = arith.addf %105, %106 : vector<4x32xf32>
    %cst_41 = arith.constant dense<0.000000e+00> : vector<32xf32>
    %108 = vector.multi_reduction <add>, %107, %cst_41 [0] : vector<4x32xf32> to vector<32xf32>
    %109 = vector.shape_cast %108 : vector<32xf32> to vector<1x32xf32>
    %cst_42 = arith.constant 1.250000e-01 : f32
    %110 = vector.broadcast %cst_42 : f32 to vector<1x32xf32>
    %111 = arith.mulf %109, %110 : vector<1x32xf32>
    %112 = tpu.concatenate %111, %111 in 1 : vector<1x32xf32>, vector<1x32xf32> -> vector<1x64xf32>
    %113 = vector.broadcast %112 : vector<1x64xf32> to vector<4x64xf32>
    %114 = arith.subf %104, %113 : vector<4x64xf32>
    %115 = arith.mulf %114, %114 : vector<4x64xf32>
    %116 = vector.extract_strided_slice %115 {offsets = [0, 0], sizes = [4, 32], strides = [1, 1]} : vector<4x64xf32> to vector<4x32xf32>
    %117 = vector.extract_strided_slice %115 {offsets = [0, 32], sizes = [4, 32], strides = [1, 1]} : vector<4x64xf32> to vector<4x32xf32>
    %118 = arith.addf %116, %117 : vector<4x32xf32>
    %cst_43 = arith.constant dense<0.000000e+00> : vector<32xf32>
    %119 = vector.multi_reduction <add>, %118, %cst_43 [0] : vector<4x32xf32> to vector<32xf32>
    %120 = vector.shape_cast %119 : vector<32xf32> to vector<1x32xf32>
    %cst_44 = arith.constant 1.250000e-01 : f32
    %121 = vector.broadcast %cst_44 : f32 to vector<1x32xf32>
    %122 = arith.mulf %120, %121 : vector<1x32xf32>
    %123 = tpu.concatenate %122, %122 in 1 : vector<1x32xf32>, vector<1x32xf32> -> vector<1x64xf32>
    %cst_45 = arith.constant 9.99999974E-6 : f32
    %124 = vector.broadcast %cst_45 : f32 to vector<1x64xf32>
    %125 = arith.addf %123, %124 : vector<1x64xf32>
    %126 = math.rsqrt %125 : vector<1x64xf32>
    %127 = vector.broadcast %126 : vector<1x64xf32> to vector<4x64xf32>
    %128 = arith.mulf %114, %127 : vector<4x64xf32>
    %c0_46 = arith.constant 0 : index
    %c0_47 = arith.constant 0 : index
    %129 = vector.load %arg9[%c0_46, %c0_47] : memref<1x64xf32, #tpu.memory_space<vmem>>, vector<1x64xf32>
    %130 = vector.broadcast %129 : vector<1x64xf32> to vector<4x64xf32>
    %131 = arith.mulf %128, %130 : vector<4x64xf32>
    %c0_48 = arith.constant 0 : index
    %c0_49 = arith.constant 0 : index
    %132 = vector.load %arg10[%c0_48, %c0_49] : memref<1x64xf32, #tpu.memory_space<vmem>>, vector<1x64xf32>
    %133 = vector.broadcast %132 : vector<1x64xf32> to vector<4x64xf32>
    %134 = arith.addf %131, %133 : vector<4x64xf32>
    %cst_50 = arith.constant 0.000000e+00 : f32
    %135 = vector.broadcast %cst_50 : f32 to vector<4x64xf32>
    %136 = arith.cmpf oge, %134, %135 : vector<4x64xf32>
    %cst_51 = arith.constant 2.000000e-01 : f32
    %137 = vector.broadcast %cst_51 : f32 to vector<4x64xf32>
    %138 = arith.mulf %137, %134 : vector<4x64xf32>
    %139 = arith.select %136, %134, %138 : vector<4x64xi1>, vector<4x64xf32>
    %140 = vector.extract_strided_slice %139 {offsets = [0, 0], sizes = [2, 64], strides = [1, 1]} : vector<4x64xf32> to vector<2x64xf32>
    %141 = vector.extract_strided_slice %139 {offsets = [2, 0], sizes = [2, 64], strides = [1, 1]} : vector<4x64xf32> to vector<2x64xf32>
    %c0_52 = arith.constant 0 : index
    %c0_53 = arith.constant 0 : index
    %142 = vector.load %arg11[%c0_52, %c0_53] : memref<4x2xf32, #tpu.memory_space<vmem>>, vector<4x2xf32>
    %cst_54 = arith.constant dense<0.000000e+00> : vector<4x64xf32>
    %143 = tpu.matmul %142, %140, %cst_54 {dimension_numbers = #tpu.dot_dimension_numbers<[1], [0], [0], [1], [0, 0, 1, 1], [], []>} : vector<4x2xf32>, vector<2x64xf32>, vector<4x64xf32> -> vector<4x64xf32>
    %144 = vector.extract_strided_slice %143 {offsets = [0, 0], sizes = [1, 64], strides = [1, 1]} : vector<4x64xf32> to vector<1x64xf32>
    %145 = vector.extract_strided_slice %143 {offsets = [1, 0], sizes = [1, 64], strides = [1, 1]} : vector<4x64xf32> to vector<1x64xf32>
    %146 = vector.extract_strided_slice %143 {offsets = [2, 0], sizes = [1, 64], strides = [1, 1]} : vector<4x64xf32> to vector<1x64xf32>
    %147 = vector.extract_strided_slice %143 {offsets = [3, 0], sizes = [1, 64], strides = [1, 1]} : vector<4x64xf32> to vector<1x64xf32>
    %148 = tpu.concatenate %144, %145, %146, %147 in 1 : vector<1x64xf32>, vector<1x64xf32>, vector<1x64xf32>, vector<1x64xf32> -> vector<1x256xf32>
    %c0_55 = arith.constant 0 : index
    %c0_56 = arith.constant 0 : index
    %149 = vector.load %arg11[%c0_55, %c0_56] : memref<4x2xf32, #tpu.memory_space<vmem>>, vector<4x2xf32>
    %cst_57 = arith.constant dense<0.000000e+00> : vector<4x64xf32>
    %150 = tpu.matmul %149, %141, %cst_57 {dimension_numbers = #tpu.dot_dimension_numbers<[1], [0], [0], [1], [0, 0, 1, 1], [], []>} : vector<4x2xf32>, vector<2x64xf32>, vector<4x64xf32> -> vector<4x64xf32>
    %151 = vector.extract_strided_slice %150 {offsets = [0, 0], sizes = [1, 64], strides = [1, 1]} : vector<4x64xf32> to vector<1x64xf32>
    %152 = vector.extract_strided_slice %150 {offsets = [1, 0], sizes = [1, 64], strides = [1, 1]} : vector<4x64xf32> to vector<1x64xf32>
    %153 = vector.extract_strided_slice %150 {offsets = [2, 0], sizes = [1, 64], strides = [1, 1]} : vector<4x64xf32> to vector<1x64xf32>
    %154 = vector.extract_strided_slice %150 {offsets = [3, 0], sizes = [1, 64], strides = [1, 1]} : vector<4x64xf32> to vector<1x64xf32>
    %155 = tpu.concatenate %151, %152, %153, %154 in 1 : vector<1x64xf32>, vector<1x64xf32>, vector<1x64xf32>, vector<1x64xf32> -> vector<1x256xf32>
    %156 = tpu.concatenate %148, %155 in 0 : vector<1x256xf32>, vector<1x256xf32> -> vector<2x256xf32>
    %c0_58 = arith.constant 0 : index
    %c0_59 = arith.constant 0 : index
    %157 = vector.load %arg12[%c0_58, %c0_59] : memref<256x64xf32, #tpu.memory_space<vmem>>, vector<256x64xf32>
    %cst_60 = arith.constant dense<0.000000e+00> : vector<2x64xf32>
    %158 = tpu.matmul %156, %157, %cst_60 {dimension_numbers = #tpu.dot_dimension_numbers<[1], [0], [0], [1], [0, 0, 1, 1], [], []>} : vector<2x256xf32>, vector<256x64xf32>, vector<2x64xf32> -> vector<2x64xf32>
    %cst_61 = arith.constant dense<0.000000e+00> : vector<64xf32>
    %159 = vector.multi_reduction <add>, %158, %cst_61 [0] : vector<2x64xf32> to vector<64xf32>
    %160 = vector.shape_cast %159 : vector<64xf32> to vector<1x64xf32>
    %cst_62 = arith.constant 5.000000e-01 : f32
    %161 = vector.broadcast %cst_62 : f32 to vector<1x64xf32>
    %162 = arith.mulf %160, %161 : vector<1x64xf32>
    %163 = vector.broadcast %162 : vector<1x64xf32> to vector<2x64xf32>
    %164 = arith.subf %158, %163 : vector<2x64xf32>
    %165 = arith.mulf %164, %164 : vector<2x64xf32>
    %cst_63 = arith.constant dense<0.000000e+00> : vector<64xf32>
    %166 = vector.multi_reduction <add>, %165, %cst_63 [0] : vector<2x64xf32> to vector<64xf32>
    %167 = vector.shape_cast %166 : vector<64xf32> to vector<1x64xf32>
    %cst_64 = arith.constant 5.000000e-01 : f32
    %168 = vector.broadcast %cst_64 : f32 to vector<1x64xf32>
    %169 = arith.mulf %167, %168 : vector<1x64xf32>
    %cst_65 = arith.constant 9.99999974E-6 : f32
    %170 = vector.broadcast %cst_65 : f32 to vector<1x64xf32>
    %171 = arith.addf %169, %170 : vector<1x64xf32>
    %172 = math.rsqrt %171 : vector<1x64xf32>
    %173 = vector.broadcast %172 : vector<1x64xf32> to vector<2x64xf32>
    %174 = arith.mulf %164, %173 : vector<2x64xf32>
    %c0_66 = arith.constant 0 : index
    %c0_67 = arith.constant 0 : index
    %175 = vector.load %arg13[%c0_66, %c0_67] : memref<1x64xf32, #tpu.memory_space<vmem>>, vector<1x64xf32>
    %176 = vector.broadcast %175 : vector<1x64xf32> to vector<2x64xf32>
    %177 = arith.mulf %174, %176 : vector<2x64xf32>
    %c0_68 = arith.constant 0 : index
    %c0_69 = arith.constant 0 : index
    %178 = vector.load %arg14[%c0_68, %c0_69] : memref<1x64xf32, #tpu.memory_space<vmem>>, vector<1x64xf32>
    %179 = vector.broadcast %178 : vector<1x64xf32> to vector<2x64xf32>
    %180 = arith.addf %177, %179 : vector<2x64xf32>
    %cst_70 = arith.constant 0.000000e+00 : f32
    %181 = vector.broadcast %cst_70 : f32 to vector<2x64xf32>
    %182 = arith.cmpf oge, %180, %181 : vector<2x64xf32>
    %cst_71 = arith.constant 2.000000e-01 : f32
    %183 = vector.broadcast %cst_71 : f32 to vector<2x64xf32>
    %184 = arith.mulf %183, %180 : vector<2x64xf32>
    %185 = arith.select %182, %180, %184 : vector<2x64xi1>, vector<2x64xf32>
    %186 = vector.extract_strided_slice %185 {offsets = [0, 0], sizes = [1, 64], strides = [1, 1]} : vector<2x64xf32> to vector<1x64xf32>
    %187 = vector.extract_strided_slice %185 {offsets = [1, 0], sizes = [1, 64], strides = [1, 1]} : vector<2x64xf32> to vector<1x64xf32>
    %188 = tpu.concatenate %186, %187 in 0 : vector<1x64xf32>, vector<1x64xf32> -> vector<2x64xf32>
    %c0_72 = arith.constant 0 : index
    %c0_73 = arith.constant 0 : index
    %189 = vector.load %arg15[%c0_72, %c0_73] : memref<64x16xf32, #tpu.memory_space<vmem>>, vector<64x16xf32>
    %cst_74 = arith.constant dense<0.000000e+00> : vector<2x16xf32>
    %190 = tpu.matmul %188, %189, %cst_74 {dimension_numbers = #tpu.dot_dimension_numbers<[1], [0], [0], [1], [0, 0, 1, 1], [], []>} : vector<2x64xf32>, vector<64x16xf32>, vector<2x16xf32> -> vector<2x16xf32>
    %c0_75 = arith.constant 0 : index
    %c0_76 = arith.constant 0 : index
    %191 = vector.load %arg16[%c0_75, %c0_76] : memref<1x16xf32, #tpu.memory_space<vmem>>, vector<1x16xf32>
    %192 = vector.broadcast %191 : vector<1x16xf32> to vector<2x16xf32>
    %193 = arith.addf %190, %192 : vector<2x16xf32>
    %c0_77 = arith.constant 0 : index
    %c0_78 = arith.constant 0 : index
    %194 = vector.load %arg17[%c0_77, %c0_78] : memref<2x16xf32, #tpu.memory_space<vmem>>, vector<2x16xf32>
    tpu.vector_store %arg17[%c0_77, %c0_78], %193 {strides = array<i32>} : memref<2x16xf32, #tpu.memory_space<vmem>>, vector<2x16xf32>,
    return
  }
}

</mosaic_0001>

<llo_original>
// kernel: tile.25
$region0: #{tile.25}
  #allocation0 [shape = 's32[1]{0}', space=sflag, size = 0x4, scoped, tag = 'scoped memory for tile.25']
  %s0 = inlined_call_operand.vmem [shape: f32[16], index: 0, kind: input, shape index: {}]
  %s1 = inlined_call_operand.vmem [shape: f32[4,16], index: 1, kind: output, shape index: {}]
  // Predicated region
  $region2: #{tile.25} parent=0 // pred_check
    _
  $region3: #{tile.25} parent=0 // pred_check_branch
    %3 = sbr.rel (0) target = $region5
  $region4: #{tile.25} parent=0 // pred_region
    _
  $region5: #{tile.25} parent=0 // pred_fallthru
    _
  %v4 = vld [vmem:[%s0] ss:$0 sm:$0xff]
  %5 = vst [vmem:[%s1] sm:$0xf] %v4

// kernel: tile.26
$region0: #{tile.26}
  %s0 = inlined_call_operand.vmem [shape: f32[4,16], index: 0, kind: input, shape index: {}]
  %s1 = inlined_call_operand.vmem [shape: f32[1,64], index: 1, kind: output, shape index: {}]
  $region1: #{tile.26} parent=0
    #allocation0 [shape = 'u8[4096]{0}', space=vmem, size = 0x1000, scoped, tag = 'scoped mem for output reshape']
    #allocation1 [shape = 'u8[4096]{0}', space=vmem, size = 0x1000, scoped, tag = 'scoped mem for input reshape']
    %s3 = sshllo.u32 0, 4
    %v4 = vld [vmem:[%s0] sm:%s3]
    %5 = vst [vmem:[#allocation1] sm:%s3] %v4
    %v6 = vld [vmem:[#allocation1] sm:$0x1]
    %vm7 = vcmask 130048
    %8 = vst.msk [vmem:[#allocation0] sm:$0x1] %vm7, %v6
    %s9 = scalar_lea.vmem [#allocation1], 3
    %v10 = vld [vmem:[%s9] sm:$0x1]
    %11 = vrot.lane.b32.xlu0 %v10, 48
    %v12 = vpop.permute.xlu0 %11
    %vm13 = vcmask 523648
    %14 = vst.msk [vmem:[#allocation0] sm:$0x1] %vm13, %v12
    %s15 = scalar_lea.vmem [#allocation1], 2
    %v16 = vld [vmem:[%s15] sm:$0x1]
    %17 = vrot.lane.b32.xlu0 %v16, 32
    %v18 = vpop.permute.xlu0 %17
    %vm19 = vcmask 392448
    %20 = vst.msk [vmem:[#allocation0] sm:$0x1] %vm19, %v18
    %s21 = scalar_lea.vmem [#allocation1], 1
    %v22 = vld [vmem:[%s21] sm:$0x1]
    %23 = vrot.lane.b32.xlu0 %v22, 16
    %v24 = vpop.permute.xlu0 %23
    %vm25 = vcmask 261248
    %26 = vst.msk [vmem:[#allocation0] sm:$0x1] %vm25, %v24
    %s28 = sshllo.u32 0, 1
    %v30 = vld [vmem:[#allocation0] sm:%s28]
    %s31 = sshllo.u32 0, 1
    %32 = vst [vmem:[%s1] sm:%s31] %v30

// kernel: tile.35
$region0: #{tile.35}
  #allocation0 [shape = 's32[1]{0}', space=sflag, size = 0x4, scoped, tag = 'scoped memory for tile.35']
  %s0 = inlined_call_operand.vmem [shape: f32[32], index: 0, kind: input, shape index: {}]
  %s1 = inlined_call_operand.vmem [shape: f32[2,32], index: 1, kind: output, shape index: {}]
  // Predicated region
  $region2: #{tile.35} parent=0 // pred_check
    _
  $region3: #{tile.35} parent=0 // pred_check_branch
    %3 = sbr.rel (0) target = $region5
  $region4: #{tile.35} parent=0 // pred_region
    _
  $region5: #{tile.35} parent=0 // pred_fallthru
    _
  %v4 = vld [vmem:[%s0] ss:$0 sm:$0xff]
  %5 = vst [vmem:[%s1] sm:$0x3] %v4

// kernel: tile.36
$region0: #{tile.36}
  %s0 = inlined_call_operand.vmem [shape: f32[2,32], index: 0, kind: input, shape index: {}]
  %s1 = inlined_call_operand.vmem [shape: f32[1,64], index: 1, kind: output, shape index: {}]
  $region1: #{tile.36} parent=0
    #allocation0 [shape = 'u8[4096]{0}', space=vmem, size = 0x1000, scoped, tag = 'scoped mem for output reshape']
    #allocation1 [shape = 'u8[4096]{0}', space=vmem, size = 0x1000, scoped, tag = 'scoped mem for input reshape']
    %s3 = sshllo.u32 0, 2
    %v4 = vld [vmem:[%s0] sm:%s3]
    %5 = vst [vmem:[#allocation1] sm:%s3] %v4
    %v6 = vld [vmem:[#allocation1] sm:$0x1]
    %vm7 = vcmask 261120
    %8 = vst.msk [vmem:[#allocation0] sm:$0x1] %vm7, %v6
    %s9 = scalar_lea.vmem [#allocation1], 1
    %v10 = vld [vmem:[%s9] sm:$0x1]
    %11 = vrot.lane.b32.xlu0 %v10, 32
    %v12 = vpop.permute.xlu0 %11
    %vm13 = vcmask 523520
    %14 = vst.msk [vmem:[#allocation0] sm:$0x1] %vm13, %v12
    %s16 = sshllo.u32 0, 1
    %v18 = vld [vmem:[#allocation0] sm:%s16]
    %s19 = sshllo.u32 0, 1
    %20 = vst [vmem:[%s1] sm:%s19] %v18

// kernel: encoder_forward.1
$region0: #{encoder_forward.1}
  #allocation0 [shape = 'u32[]', space=smem, size = 0x4, offset = 0x4, fixed_abs, tag = 'smem constant byte address 0x4 - core index']
  #allocation1 [shape = 'u32[144,128]{1,0:T(1,128)}', space=vmem, size = 0x12000, scoped, tag = 'internal scratch']
  %s0 = inlined_call_operand.vmem [shape: f32[32,48], index: 0, kind: input, shape index: {}]
  %s1 = inlined_call_operand.vmem [shape: f32[32,16], index: 1, kind: input, shape index: {}]
  %s2 = inlined_call_operand.vmem [shape: f32[192,64], index: 2, kind: input, shape index: {}]
  %s3 = inlined_call_operand.vmem [shape: f32[16,8], index: 3, kind: input, shape index: {}]
  %s4 = inlined_call_operand.vmem [shape: f32[256,64], index: 4, kind: input, shape index: {}]
  %s5 = inlined_call_operand.vmem [shape: f32[1,64], index: 5, kind: input, shape index: {}]
  %s6 = inlined_call_operand.vmem [shape: f32[1,64], index: 6, kind: input, shape index: {}]
  %s7 = inlined_call_operand.vmem [shape: f32[8,4], index: 7, kind: input, shape index: {}]
  %s8 = inlined_call_operand.vmem [shape: f32[256,64], index: 8, kind: input, shape index: {}]
  %s9 = inlined_call_operand.vmem [shape: f32[1,64], index: 9, kind: input, shape index: {}]
  %s10 = inlined_call_operand.vmem [shape: f32[1,64], index: 10, kind: input, shape index: {}]
  %s11 = inlined_call_operand.vmem [shape: f32[4,2], index: 11, kind: input, shape index: {}]
  %s12 = inlined_call_operand.vmem [shape: f32[256,64], index: 12, kind: input, shape index: {}]
  %s13 = inlined_call_operand.vmem [shape: f32[1,64], index: 13, kind: input, shape index: {}]
  %s14 = inlined_call_operand.vmem [shape: f32[1,64], index: 14, kind: input, shape index: {}]
  %s15 = inlined_call_operand.vmem [shape: f32[64,16], index: 15, kind: input, shape index: {}]
  %s16 = inlined_call_operand.vmem [shape: f32[1,16], index: 16, kind: input, shape index: {}]
  %s17 = inlined_call_operand.hbm [shape: f32[2,16], index: 17, kind: output, shape index: {}]
  %s18 = sld [smem:[#allocation0]]
  $region78: #{encoder_forward.1} parent=0
    _
  %s20 = ssub.s32 1, %s18
  %s21 = scalar_select 0, %s20, %s18
  $region1: #{encoder_forward.1} parent=0
    #allocation2 [shape = 'u8[1024]{0}', space=vmem, size = 0x400, scoped, tag = 'output window, operand 0, single buffered']
    #allocation3 [shape = 's32[1]{0}', space=sflag, size = 0x4, scoped, tag = 'scoped memory for encoder_forward.1']
    %22 = vsyncpa [#allocation3], 0
    // Predicated region
    $region2: #{encoder_forward.1} parent=1 // pred_check
      _
    $region3: #{encoder_forward.1} parent=1 // pred_check_branch
      %24 = sbr.rel (0) target = $region5
    $region4: #{encoder_forward.1} parent=1 // pred_region
      _
    $region5: #{encoder_forward.1} parent=1 // pred_fallthru
      _
    // Predicated region
    $region6: #{encoder_forward.1} parent=1 // pred_check
      _
    $region7: #{encoder_forward.1} parent=1 // pred_check_branch
      %26 = sbr.rel (0) target = $region9
    $region8: #{encoder_forward.1} parent=1 // pred_region
      _
    $region9: #{encoder_forward.1} parent=1 // pred_fallthru
      _
    // Predicated region
    $region10: #{encoder_forward.1} parent=1 // pred_check
      _
    $region11: #{encoder_forward.1} parent=1 // pred_check_branch
      %28 = sbr.rel (0) target = $region13
    $region12: #{encoder_forward.1} parent=1 // pred_region
      _
    $region13: #{encoder_forward.1} parent=1 // pred_fallthru
      _
    // Predicated region
    $region14: #{encoder_forward.1} parent=1 // pred_check
      _
    $region15: #{encoder_forward.1} parent=1 // pred_check_branch
      %30 = sbr.rel (0) target = $region17
    $region16: #{encoder_forward.1} parent=1 // pred_region
      _
    $region17: #{encoder_forward.1} parent=1 // pred_fallthru
      _
    // Predicated region
    $region18: #{encoder_forward.1} parent=1 // pred_check
      _
    $region19: #{encoder_forward.1} parent=1 // pred_check_branch
      %32 = sbr.rel (0) target = $region21
    $region20: #{encoder_forward.1} parent=1 // pred_region
      _
    $region21: #{encoder_forward.1} parent=1 // pred_fallthru
      _
    // Predicated region
    $region22: #{encoder_forward.1} parent=1 // pred_check
      _
    $region23: #{encoder_forward.1} parent=1 // pred_check_branch
      %34 = sbr.rel (0) target = $region25
    $region24: #{encoder_forward.1} parent=1 // pred_region
      _
    $region25: #{encoder_forward.1} parent=1 // pred_fallthru
      _
    // Predicated region
    $region26: #{encoder_forward.1} parent=1 // pred_check
      _
    $region27: #{encoder_forward.1} parent=1 // pred_check_branch
      %36 = sbr.rel (0) target = $region29
    $region28: #{encoder_forward.1} parent=1 // pred_region
      _
    $region29: #{encoder_forward.1} parent=1 // pred_fallthru
      _
    // Predicated region
    $region30: #{encoder_forward.1} parent=1 // pred_check
      _
    $region31: #{encoder_forward.1} parent=1 // pred_check_branch
      %38 = sbr.rel (0) target = $region33
    $region32: #{encoder_forward.1} parent=1 // pred_region
      _
    $region33: #{encoder_forward.1} parent=1 // pred_fallthru
      _
    // Predicated region
    $region34: #{encoder_forward.1} parent=1 // pred_check
      _
    $region35: #{encoder_forward.1} parent=1 // pred_check_branch
      %40 = sbr.rel (0) target = $region37
    $region36: #{encoder_forward.1} parent=1 // pred_region
      _
    $region37: #{encoder_forward.1} parent=1 // pred_fallthru
      _
    // Predicated region
    $region38: #{encoder_forward.1} parent=1 // pred_check
      _
    $region39: #{encoder_forward.1} parent=1 // pred_check_branch
      %42 = sbr.rel (0) target = $region41
    $region40: #{encoder_forward.1} parent=1 // pred_region
      _
    $region41: #{encoder_forward.1} parent=1 // pred_fallthru
      _
    // Predicated region
    $region42: #{encoder_forward.1} parent=1 // pred_check
      _
    $region43: #{encoder_forward.1} parent=1 // pred_check_branch
      %44 = sbr.rel (0) target = $region45
    $region44: #{encoder_forward.1} parent=1 // pred_region
      _
    $region45: #{encoder_forward.1} parent=1 // pred_fallthru
      _
    // Predicated region
    $region46: #{encoder_forward.1} parent=1 // pred_check
      _
    $region47: #{encoder_forward.1} parent=1 // pred_check_branch
      %46 = sbr.rel (0) target = $region49
    $region48: #{encoder_forward.1} parent=1 // pred_region
      _
    $region49: #{encoder_forward.1} parent=1 // pred_fallthru
      _
    // Predicated region
    $region50: #{encoder_forward.1} parent=1 // pred_check
      _
    $region51: #{encoder_forward.1} parent=1 // pred_check_branch
      %48 = sbr.rel (0) target = $region53
    $region52: #{encoder_forward.1} parent=1 // pred_region
      _
    $region53: #{encoder_forward.1} parent=1 // pred_fallthru
      _
    // Predicated region
    $region54: #{encoder_forward.1} parent=1 // pred_check
      _
    $region55: #{encoder_forward.1} parent=1 // pred_check_branch
      %50 = sbr.rel (0) target = $region57
    $region56: #{encoder_forward.1} parent=1 // pred_region
      _
    $region57: #{encoder_forward.1} parent=1 // pred_fallthru
      _
    // Predicated region
    $region58: #{encoder_forward.1} parent=1 // pred_check
      _
    $region59: #{encoder_forward.1} parent=1 // pred_check_branch
      %52 = sbr.rel (0) target = $region61
    $region60: #{encoder_forward.1} parent=1 // pred_region
      _
    $region61: #{encoder_forward.1} parent=1 // pred_fallthru
      _
    // Predicated region
    $region62: #{encoder_forward.1} parent=1 // pred_check
      _
    $region63: #{encoder_forward.1} parent=1 // pred_check_branch
      %54 = sbr.rel (0) target = $region65
    $region64: #{encoder_forward.1} parent=1 // pred_region
      _
    $region65: #{encoder_forward.1} parent=1 // pred_fallthru
      _
    // Predicated region
    $region66: #{encoder_forward.1} parent=1 // pred_check
      _
    $region67: #{encoder_forward.1} parent=1 // pred_check_branch
      %56 = sbr.rel (0) target = $region69
    $region68: #{encoder_forward.1} parent=1 // pred_region
      _
    $region69: #{encoder_forward.1} parent=1 // pred_fallthru
      _
    %v57 = vld [vmem:[%s0] sm:$0xff]
    %v58 = vld [vmem:[%s0 + $0x8] sm:$0xff]
    %v59 = vld [vmem:[%s0 + $0x10] sm:$0xff]
    %v60 = vld [vmem:[%s0 + $0x18] sm:$0xff]
    %v61 = vld [vmem:[%s1] sm:$0xff]
    %v62 = vld [vmem:[%s1 + $0x8] sm:$0xff]
    %v63 = vld [vmem:[%s1 + $0x10] sm:$0xff]
    %v64 = vld [vmem:[%s1 + $0x18] sm:$0xff]
    %vm65 = vcmask 130048
    %v67 = vsel %vm65, %v61, 0
    %v70 = vsel %vm65, %v62, 0
    %v73 = vsel %vm65, %v63, 0
    %v76 = vsel %vm65, %v64, 0
    %78 = vmatprep.subr.mxu0 0.0
    %79 = vmatpush1.msra.mxu0 %v57
    %80 = vmatprep.subr.mxu0 0.0
    %81 = vmatpush1.msra.mxu0 %v58
    %82 = vmatprep.subr.mxu0 0.0
    %83 = vmatpush1.msra.mxu0 0.0
    %84 = vmatprep.subr.mxu0 0.0
    %85 = vmatpush1.msra.mxu0 0.0
    %86 = vmatprep.subr.mxu0 0.0
    %87 = vmatpush1.msra.mxu0 0.0
    %88 = vmatprep.subr.mxu0 0.0
    %89 = vmatpush1.msra.mxu0 0.0
    %90 = vmatprep.subr.mxu0 0.0
    %91 = vmatpush1.msra.mxu0 0.0
    %92 = vmatprep.subr.mxu0 0.0
    %93 = vmatpush1.msra.mxu0 0.0
    %94 = vmatprep.subr.mxu0 0.0
    %95 = vmatpush1.msra.mxu0 0.0
    %96 = vmatprep.subr.mxu0 0.0
    %97 = vmatpush1.msra.mxu0 0.0
    %98 = vmatprep.subr.mxu0 0.0
    %99 = vmatpush1.msra.mxu0 0.0
    %100 = vmatprep.subr.mxu0 0.0
    %101 = vmatpush1.msra.mxu0 0.0
    %102 = vmatprep.subr.mxu0 0.0
    %103 = vmatpush1.msra.mxu0 0.0
    %104 = vmatprep.subr.mxu0 0.0
    %105 = vmatpush1.msra.mxu0 0.0
    %106 = vmatprep.subr.mxu0 0.0
    %107 = vmatpush1.msra.mxu0 0.0
    %108 = vmatprep.subr.mxu0 0.0
    %109 = vmatpush1.msra.mxu0 0.0
    %110 = vmatprep.subr.mxu0 0.0
    %111 = vmatpush1.msra.mxu0 0.0
    %112 = vmatprep.subr.mxu0 0.0
    %113 = vmatpush1.msra.mxu0 0.0
    %114 = vmatprep.subr.mxu0 0.0
    %115 = vmatpush1.msra.mxu0 0.0
    %116 = vmatprep.subr.mxu0 0.0
    %117 = vmatpush1.msra.mxu0 0.0
    %118 = vmatprep.subr.mxu0 0.0
    %119 = vmatpush1.msra.mxu0 0.0
    %120 = vmatprep.subr.mxu0 0.0
    %121 = vmatpush1.msra.mxu0 0.0
    %122 = vmatprep.subr.mxu0 0.0
    %123 = vmatpush1.msra.mxu0 0.0
    %124 = vmatprep.subr.mxu0 0.0
    %125 = vmatpush1.msra.mxu0 0.0
    %126 = vmatprep.subr.mxu0 0.0
    %127 = vmatpush1.msra.mxu0 0.0
    %128 = vmatprep.subr.mxu0 0.0
    %129 = vmatpush1.msra.mxu0 0.0
    %130 = vmatprep.subr.mxu0 0.0
    %131 = vmatpush1.msra.mxu0 0.0
    %132 = vmatprep.subr.mxu0 0.0
    %133 = vmatpush1.msra.mxu0 0.0
    %134 = vmatprep.subr.mxu0 0.0
    %135 = vmatpush1.msra.mxu0 0.0
    %136 = vmatprep.subr.mxu0 0.0
    %137 = vmatpush1.msra.mxu0 0.0
    %138 = vmatprep.subr.mxu0 0.0
    %139 = vmatpush1.msra.mxu0 0.0
    %140 = vmatprep.subr.mxu0 0.0
    %141 = vmatpush1.msra.mxu0 0.0
    %142 = vmatprep.mubr.f32.mxu0 0.0
    %143 = vmatmul.mubr.f32.gmra.mrb[0].mxu0 %v67
    %v144 = vpop.f32.mrb[0].mxu0
    %v145 = vadd.f32 0.0, %v144
    %v146 = vpop.f32.mrb[0].mxu0
    %147 = vmatprep.mubr.f32.mxu0 0.0
    %148 = vmatmul.mubr.f32.gmra.mrb[0].mxu0 %v70
    %v149 = vpop.f32.mrb[0].mxu0
    %v150 = vadd.f32 0.0, %v149
    %v151 = vpop.f32.mrb[0].mxu0
    %152 = vmatprep.mubr.f32.mxu0 0.0
    %153 = vmatmul.mubr.f32.gmra.mrb[0].mxu0 %v73
    %v154 = vpop.f32.mrb[0].mxu0
    %v155 = vadd.f32 0.0, %v154
    %v156 = vpop.f32.mrb[0].mxu0
    %157 = vmatprep.mubr.f32.mxu0 0.0
    %158 = vmatmul.mubr.f32.gmra.mrb[0].mxu0 %v76
    %v159 = vpop.f32.mrb[0].mxu0
    %v160 = vadd.f32 0.0, %v159
    %v161 = vpop.f32.mrb[0].mxu0
    %162 = vdwg.mxu0
    %164 = vrot.lane.b32.xlu0 %v150, 48
    %v165 = vpop.permute.xlu0 %164
    %168 = vrot.lane.b32.xlu0 %v155, 96
    %v169 = vpop.permute.xlu0 %168
    %172 = vrot.lane.b32.xlu0 %v160, 16
    %v173 = vpop.permute.xlu0 %172
    %vm175 = vcmask 392192
    %v176 = vsel %vm175, %v145, %v165
    %vm177 = vcmask 785408
    %v178 = vsel %vm177, %v176, %v169
    %v179 = vsel %vm65, %v169, %v173
    %180 = vmatprep.subr.mxu0 0.0
    %181 = vmatpush1.msra.mxu0 %v59
    %182 = vmatprep.subr.mxu0 0.0
    %183 = vmatpush1.msra.mxu0 %v60
    %184 = vmatprep.subr.mxu0 0.0
    %185 = vmatpush1.msra.mxu0 0.0
    %186 = vmatprep.subr.mxu0 0.0
    %187 = vmatpush1.msra.mxu0 0.0
    %188 = vmatprep.subr.mxu0 0.0
    %189 = vmatpush1.msra.mxu0 0.0
    %190 = vmatprep.subr.mxu0 0.0
    %191 = vmatpush1.msra.mxu0 0.0
    %192 = vmatprep.subr.mxu0 0.0
    %193 = vmatpush1.msra.mxu0 0.0
    %194 = vmatprep.subr.mxu0 0.0
    %195 = vmatpush1.msra.mxu0 0.0
    %196 = vmatprep.subr.mxu0 0.0
    %197 = vmatpush1.msra.mxu0 0.0
    %198 = vmatprep.subr.mxu0 0.0
    %199 = vmatpush1.msra.mxu0 0.0
    %200 = vmatprep.subr.mxu0 0.0
    %201 = vmatpush1.msra.mxu0 0.0
    %202 = vmatprep.subr.mxu0 0.0
    %203 = vmatpush1.msra.mxu0 0.0
    %204 = vmatprep.subr.mxu0 0.0
    %205 = vmatpush1.msra.mxu0 0.0
    %206 = vmatprep.subr.mxu0 0.0
    %207 = vmatpush1.msra.mxu0 0.0
    %208 = vmatprep.subr.mxu0 0.0
    %209 = vmatpush1.msra.mxu0 0.0
    %210 = vmatprep.subr.mxu0 0.0
    %211 = vmatpush1.msra.mxu0 0.0
    %212 = vmatprep.subr.mxu0 0.0
    %213 = vmatpush1.msra.mxu0 0.0
    %214 = vmatprep.subr.mxu0 0.0
    %215 = vmatpush1.msra.mxu0 0.0
    %216 = vmatprep.subr.mxu0 0.0
    %217 = vmatpush1.msra.mxu0 0.0
    %218 = vmatprep.subr.mxu0 0.0
    %219 = vmatpush1.msra.mxu0 0.0
    %220 = vmatprep.subr.mxu0 0.0
    %221 = vmatpush1.msra.mxu0 0.0
    %222 = vmatprep.subr.mxu0 0.0
    %223 = vmatpush1.msra.mxu0 0.0
    %224 = vmatprep.subr.mxu0 0.0
    %225 = vmatpush1.msra.mxu0 0.0
    %226 = vmatprep.subr.mxu0 0.0
    %227 = vmatpush1.msra.mxu0 0.0
    %228 = vmatprep.subr.mxu0 0.0
    %229 = vmatpush1.msra.mxu0 0.0
    %230 = vmatprep.subr.mxu0 0.0
    %231 = vmatpush1.msra.mxu0 0.0
    %232 = vmatprep.subr.mxu0 0.0
    %233 = vmatpush1.msra.mxu0 0.0
    %234 = vmatprep.subr.mxu0 0.0
    %235 = vmatpush1.msra.mxu0 0.0
    %236 = vmatprep.subr.mxu0 0.0
    %237 = vmatpush1.msra.mxu0 0.0
    %238 = vmatprep.subr.mxu0 0.0
    %239 = vmatpush1.msra.mxu0 0.0
    %240 = vmatprep.subr.mxu0 0.0
    %241 = vmatpush1.msra.mxu0 0.0
    %242 = vmatprep.subr.mxu0 0.0
    %243 = vmatpush1.msra.mxu0 0.0
    %244 = vmatprep.mubr.f32.mxu0 0.0
    %245 = vmatmul.mubr.f32.gmra.mrb[0].mxu0 %v67
    %v246 = vpop.f32.mrb[0].mxu0
    %v247 = vadd.f32 0.0, %v246
    %v248 = vpop.f32.mrb[0].mxu0
    %249 = vmatprep.mubr.f32.mxu0 0.0
    %250 = vmatmul.mubr.f32.gmra.mrb[0].mxu0 %v70
    %v251 = vpop.f32.mrb[0].mxu0
    %v252 = vadd.f32 0.0, %v251
    %v253 = vpop.f32.mrb[0].mxu0
    %254 = vmatprep.mubr.f32.mxu0 0.0
    %255 = vmatmul.mubr.f32.gmra.mrb[0].mxu0 %v73
    %v256 = vpop.f32.mrb[0].mxu0
    %v257 = vadd.f32 0.0, %v256
    %v258 = vpop.f32.mrb[0].mxu0
    %259 = vmatprep.mubr.f32.mxu0 0.0
    %260 = vmatmul.mubr.f32.gmra.mrb[0].mxu0 %v76
    %v261 = vpop.f32.mrb[0].mxu0
    %v262 = vadd.f32 0.0, %v261
    %v263 = vpop.f32.mrb[0].mxu0
    %264 = vdwg.mxu0
    %266 = vrot.lane.b32.xlu0 %v252, 48
    %v267 = vpop.permute.xlu0 %266
    %270 = vrot.lane.b32.xlu0 %v257, 96
    %v271 = vpop.permute.xlu0 %270
    %274 = vrot.lane.b32.xlu0 %v262, 16
    %v275 = vpop.permute.xlu0 %274
    %v277 = vsel %vm175, %v247, %v267
    %v278 = vsel %vm177, %v277, %v271
    %v279 = vsel %vm65, %v271, %v275
    %v280 = vld [vmem:[%s2] sm:$0xff]
    %v281 = vld [vmem:[%s2 + $0x8] sm:$0xff]
    %v282 = vld [vmem:[%s2 + $0x10] sm:$0xff]
    %v283 = vld [vmem:[%s2 + $0x18] sm:$0xff]
    %v284 = vld [vmem:[%s2 + $0x20] sm:$0xff]
    %v285 = vld [vmem:[%s2 + $0x28] sm:$0xff]
    %v286 = vld [vmem:[%s2 + $0x30] sm:$0xff]
    %v287 = vld [vmem:[%s2 + $0x38] sm:$0xff]
    %v288 = vld [vmem:[%s2 + $0x40] sm:$0xff]
    %v289 = vld [vmem:[%s2 + $0x48] sm:$0xff]
    %v290 = vld [vmem:[%s2 + $0x50] sm:$0xff]
    %v291 = vld [vmem:[%s2 + $0x58] sm:$0xff]
    %v292 = vld [vmem:[%s2 + $0x60] sm:$0xff]
    %v293 = vld [vmem:[%s2 + $0x68] sm:$0xff]
    %v294 = vld [vmem:[%s2 + $0x70] sm:$0xff]
    %v295 = vld [vmem:[%s2 + $0x78] sm:$0xff]
    %v296 = vld [vmem:[%s2 + $0x80] sm:$0xff]
    %v297 = vld [vmem:[%s2 + $0x88] sm:$0xff]
    %v298 = vld [vmem:[%s2 + $0x90] sm:$0xff]
    %v299 = vld [vmem:[%s2 + $0x98] sm:$0xff]
    %v300 = vld [vmem:[%s2 + $0xa0] sm:$0xff]
    %v301 = vld [vmem:[%s2 + $0xa8] sm:$0xff]
    %v302 = vld [vmem:[%s2 + $0xb0] sm:$0xff]
    %v303 = vld [vmem:[%s2 + $0xb8] sm:$0xff]
    %vm304 = vcmask 523264
    %v306 = vsel %vm304, %v179, 0
    %v309 = vsel %vm304, %v279, 0
    %311 = vmatprep.subr.mxu0 0.0
    %312 = vmatpush1.msra.mxu0 %v280
    %313 = vmatprep.subr.mxu0 0.0
    %314 = vmatpush1.msra.mxu0 %v281
    %315 = vmatprep.subr.mxu0 0.0
    %316 = vmatpush1.msra.mxu0 %v282
    %317 = vmatprep.subr.mxu0 0.0
    %318 = vmatpush1.msra.mxu0 %v283
    %319 = vmatprep.subr.mxu0 0.0
    %320 = vmatpush1.msra.mxu0 %v284
    %321 = vmatprep.subr.mxu0 0.0
    %322 = vmatpush1.msra.mxu0 %v285
    %323 = vmatprep.subr.mxu0 0.0
    %324 = vmatpush1.msra.mxu0 %v286
    %325 = vmatprep.subr.mxu0 0.0
    %326 = vmatpush1.msra.mxu0 %v287
    %327 = vmatprep.subr.mxu0 0.0
    %328 = vmatpush1.msra.mxu0 %v288
    %329 = vmatprep.subr.mxu0 0.0
    %330 = vmatpush1.msra.mxu0 %v289
    %331 = vmatprep.subr.mxu0 0.0
    %332 = vmatpush1.msra.mxu0 %v290
    %333 = vmatprep.subr.mxu0 0.0
    %334 = vmatpush1.msra.mxu0 %v291
    %335 = vmatprep.subr.mxu0 0.0
    %336 = vmatpush1.msra.mxu0 %v292
    %337 = vmatprep.subr.mxu0 0.0
    %338 = vmatpush1.msra.mxu0 %v293
    %339 = vmatprep.subr.mxu0 0.0
    %340 = vmatpush1.msra.mxu0 %v294
    %341 = vmatprep.subr.mxu0 0.0
    %342 = vmatpush1.msra.mxu0 %v295
    %343 = vmatprep.subr.mxu0 0.0
    %344 = vmatpush1.msra.mxu0 %v296
    %345 = vmatprep.subr.mxu0 0.0
    %346 = vmatpush1.msra.mxu0 %v297
    %347 = vmatprep.subr.mxu0 0.0
    %348 = vmatpush1.msra.mxu0 %v298
    %349 = vmatprep.subr.mxu0 0.0
    %350 = vmatpush1.msra.mxu0 %v299
    %351 = vmatprep.subr.mxu0 0.0
    %352 = vmatpush1.msra.mxu0 %v300
    %353 = vmatprep.subr.mxu0 0.0
    %354 = vmatpush1.msra.mxu0 %v301
    %355 = vmatprep.subr.mxu0 0.0
    %356 = vmatpush1.msra.mxu0 %v302
    %357 = vmatprep.subr.mxu0 0.0
    %358 = vmatpush1.msra.mxu0 %v303
    %359 = vmatprep.subr.mxu0 0.0
    %360 = vmatpush1.msra.mxu0 0.0
    %361 = vmatprep.subr.mxu0 0.0
    %362 = vmatpush1.msra.mxu0 0.0
    %363 = vmatprep.subr.mxu0 0.0
    %364 = vmatpush1.msra.mxu0 0.0
    %365 = vmatprep.subr.mxu0 0.0
    %366 = vmatpush1.msra.mxu0 0.0
    %367 = vmatprep.subr.mxu0 0.0
    %368 = vmatpush1.msra.mxu0 0.0
    %369 = vmatprep.subr.mxu0 0.0
    %370 = vmatpush1.msra.mxu0 0.0
    %371 = vmatprep.subr.mxu0 0.0
    %372 = vmatpush1.msra.mxu0 0.0
    %373 = vmatprep.subr.mxu0 0.0
    %374 = vmatpush1.msra.mxu0 0.0
    %375 = vmatprep.mubr.f32.mxu0 %v306
    %376 = vmatmul.mubr.f32.gmra.mrb[0].mxu0 %v178
    %v377 = vpop.f32.mrb[0].mxu0
    %v378 = vadd.f32 0.0, %v377
    %v379 = vpop.f32.mrb[0].mxu0
    %380 = vmatprep.mubr.f32.mxu0 %v309
    %381 = vmatmul.mubr.f32.gmra.mrb[0].mxu0 %v278
    %v382 = vpop.f32.mrb[0].mxu0
    %v383 = vadd.f32 0.0, %v382
    %v384 = vpop.f32.mrb[0].mxu0
    %385 = vdwg.mxu0
    %vm386 = vcmp.ge.f32.partialorder %v378, 0.0
    %vm387 = vcmp.ge.f32.partialorder %v383, 0.0
    %v388 = vmul.f32 %v378, 0.2
    %v389 = vmul.f32 %v383, 0.2
    %v390 = vsel %vm386, %v378, %v388
    %v391 = vsel %vm387, %v383, %v389
    %v392 = vld [vmem:[%s3] sm:$0xff]
    %v393 = vld [vmem:[%s3 + $0x8] sm:$0xff]
    %vm394 = vcmask 64512
    %v396 = vsel %vm394, %v392, 0
    %v399 = vsel %vm394, %v393, 0
    %401 = vmatprep.subr.mxu0 0.0
    %402 = vmatpush1.msra.mxu0 %v390
    %403 = vmatprep.subr.mxu0 0.0
    %404 = vmatpush1.msra.mxu0 0.0
    %405 = vmatprep.subr.mxu0 0.0
    %406 = vmatpush1.msra.mxu0 0.0
    %407 = vmatprep.subr.mxu0 0.0
    %408 = vmatpush1.msra.mxu0 0.0
    %409 = vmatprep.subr.mxu0 0.0
    %410 = vmatpush1.msra.mxu0 0.0
    %411 = vmatprep.subr.mxu0 0.0
    %412 = vmatpush1.msra.mxu0 0.0
    %413 = vmatprep.subr.mxu0 0.0
    %414 = vmatpush1.msra.mxu0 0.0
    %415 = vmatprep.subr.mxu0 0.0
    %416 = vmatpush1.msra.mxu0 0.0
    %417 = vmatprep.subr.mxu0 0.0
    %418 = vmatpush1.msra.mxu0 0.0
    %419 = vmatprep.subr.mxu0 0.0
    %420 = vmatpush1.msra.mxu0 0.0
    %421 = vmatprep.subr.mxu0 0.0
    %422 = vmatpush1.msra.mxu0 0.0
    %423 = vmatprep.subr.mxu0 0.0
    %424 = vmatpush1.msra.mxu0 0.0
    %425 = vmatprep.subr.mxu0 0.0
    %426 = vmatpush1.msra.mxu0 0.0
    %427 = vmatprep.subr.mxu0 0.0
    %428 = vmatpush1.msra.mxu0 0.0
    %429 = vmatprep.subr.mxu0 0.0
    %430 = vmatpush1.msra.mxu0 0.0
    %431 = vmatprep.subr.mxu0 0.0
    %432 = vmatpush1.msra.mxu0 0.0
    %433 = vmatprep.subr.mxu0 0.0
    %434 = vmatpush1.msra.mxu0 0.0
    %435 = vmatprep.subr.mxu0 0.0
    %436 = vmatpush1.msra.mxu0 0.0
    %437 = vmatprep.subr.mxu0 0.0
    %438 = vmatpush1.msra.mxu0 0.0
    %439 = vmatprep.subr.mxu0 0.0
    %440 = vmatpush1.msra.mxu0 0.0
    %441 = vmatprep.subr.mxu0 0.0
    %442 = vmatpush1.msra.mxu0 0.0
    %443 = vmatprep.subr.mxu0 0.0
    %444 = vmatpush1.msra.mxu0 0.0
    %445 = vmatprep.subr.mxu0 0.0
    %446 = vmatpush1.msra.mxu0 0.0
    %447 = vmatprep.subr.mxu0 0.0
    %448 = vmatpush1.msra.mxu0 0.0
    %449 = vmatprep.subr.mxu0 0.0
    %450 = vmatpush1.msra.mxu0 0.0
    %451 = vmatprep.subr.mxu0 0.0
    %452 = vmatpush1.msra.mxu0 0.0
    %453 = vmatprep.subr.mxu0 0.0
    %454 = vmatpush1.msra.mxu0 0.0
    %455 = vmatprep.subr.mxu0 0.0
    %456 = vmatpush1.msra.mxu0 0.0
    %457 = vmatprep.subr.mxu0 0.0
    %458 = vmatpush1.msra.mxu0 0.0
    %459 = vmatprep.subr.mxu0 0.0
    %460 = vmatpush1.msra.mxu0 0.0
    %461 = vmatprep.subr.mxu0 0.0
    %462 = vmatpush1.msra.mxu0 0.0
    %463 = vmatprep.subr.mxu0 0.0
    %464 = vmatpush1.msra.mxu0 0.0
    %465 = vmatprep.mubr.f32.mxu0 0.0
    %466 = vmatmul.mubr.f32.gmra.mrb[0].mxu0 %v396
    %v467 = vpop.f32.mrb[0].mxu0
    %v468 = vadd.f32 0.0, %v467
    %v469 = vpop.f32.mrb[0].mxu0
    %470 = vmatprep.mubr.f32.mxu0 0.0
    %471 = vmatmul.mubr.f32.gmra.mrb[0].mxu0 %v399
    %v472 = vpop.f32.mrb[0].mxu0
    %v473 = vadd.f32 0.0, %v472
    %v474 = vpop.f32.mrb[0].mxu0
    %475 = vdwg.mxu0
    %v477 = vrot.slane %v468, 4
    %478 = vrot.lane.b32.xlu0 %v477, 64
    %v479 = vpop.permute.xlu0 %478
    %v482 = vrot.slane %v473, 4
    %483 = vrot.lane.b32.xlu0 %v482, 64
    %v484 = vpop.permute.xlu0 %483
    %v486 = vsel %vm304, %v468, %v479
    %v487 = vsel %vm304, %v473, %v484
    %488 = vmatprep.subr.mxu0 0.0
    %489 = vmatpush1.msra.mxu0 %v391
    %490 = vmatprep.subr.mxu0 0.0
    %491 = vmatpush1.msra.mxu0 0.0
    %492 = vmatprep.subr.mxu0 0.0
    %493 = vmatpush1.msra.mxu0 0.0
    %494 = vmatprep.subr.mxu0 0.0
    %495 = vmatpush1.msra.mxu0 0.0
    %496 = vmatprep.subr.mxu0 0.0
    %497 = vmatpush1.msra.mxu0 0.0
    %498 = vmatprep.subr.mxu0 0.0
    %499 = vmatpush1.msra.mxu0 0.0
    %500 = vmatprep.subr.mxu0 0.0
    %501 = vmatpush1.msra.mxu0 0.0
    %502 = vmatprep.subr.mxu0 0.0
    %503 = vmatpush1.msra.mxu0 0.0
    %504 = vmatprep.subr.mxu0 0.0
    %505 = vmatpush1.msra.mxu0 0.0
    %506 = vmatprep.subr.mxu0 0.0
    %507 = vmatpush1.msra.mxu0 0.0
    %508 = vmatprep.subr.mxu0 0.0
    %509 = vmatpush1.msra.mxu0 0.0
    %510 = vmatprep.subr.mxu0 0.0
    %511 = vmatpush1.msra.mxu0 0.0
    %512 = vmatprep.subr.mxu0 0.0
    %513 = vmatpush1.msra.mxu0 0.0
    %514 = vmatprep.subr.mxu0 0.0
    %515 = vmatpush1.msra.mxu0 0.0
    %516 = vmatprep.subr.mxu0 0.0
    %517 = vmatpush1.msra.mxu0 0.0
    %518 = vmatprep.subr.mxu0 0.0
    %519 = vmatpush1.msra.mxu0 0.0
    %520 = vmatprep.subr.mxu0 0.0
    %521 = vmatpush1.msra.mxu0 0.0
    %522 = vmatprep.subr.mxu0 0.0
    %523 = vmatpush1.msra.mxu0 0.0
    %524 = vmatprep.subr.mxu0 0.0
    %525 = vmatpush1.msra.mxu0 0.0
    %526 = vmatprep.subr.mxu0 0.0
    %527 = vmatpush1.msra.mxu0 0.0
    %528 = vmatprep.subr.mxu0 0.0
    %529 = vmatpush1.msra.mxu0 0.0
    %530 = vmatprep.subr.mxu0 0.0
    %531 = vmatpush1.msra.mxu0 0.0
    %532 = vmatprep.subr.mxu0 0.0
    %533 = vmatpush1.msra.mxu0 0.0
    %534 = vmatprep.subr.mxu0 0.0
    %535 = vmatpush1.msra.mxu0 0.0
    %536 = vmatprep.subr.mxu0 0.0
    %537 = vmatpush1.msra.mxu0 0.0
    %538 = vmatprep.subr.mxu0 0.0
    %539 = vmatpush1.msra.mxu0 0.0
    %540 = vmatprep.subr.mxu0 0.0
    %541 = vmatpush1.msra.mxu0 0.0
    %542 = vmatprep.subr.mxu0 0.0
    %543 = vmatpush1.msra.mxu0 0.0
    %544 = vmatprep.subr.mxu0 0.0
    %545 = vmatpush1.msra.mxu0 0.0
    %546 = vmatprep.subr.mxu0 0.0
    %547 = vmatpush1.msra.mxu0 0.0
    %548 = vmatprep.subr.mxu0 0.0
    %549 = vmatpush1.msra.mxu0 0.0
    %550 = vmatprep.subr.mxu0 0.0
    %551 = vmatpush1.msra.mxu0 0.0
    %552 = vmatprep.mubr.f32.mxu0 0.0
    %553 = vmatmul.mubr.f32.gmra.mrb[0].mxu0 %v396
    %v554 = vpop.f32.mrb[0].mxu0
    %v555 = vadd.f32 0.0, %v554
    %v556 = vpop.f32.mrb[0].mxu0
    %557 = vmatprep.mubr.f32.mxu0 0.0
    %558 = vmatmul.mubr.f32.gmra.mrb[0].mxu0 %v399
    %v559 = vpop.f32.mrb[0].mxu0
    %v560 = vadd.f32 0.0, %v559
    %v561 = vpop.f32.mrb[0].mxu0
    %562 = vdwg.mxu0
    %v564 = vrot.slane %v555, 4
    %565 = vrot.lane.b32.xlu0 %v564, 64
    %v566 = vpop.permute.xlu0 %565
    %v569 = vrot.slane %v560, 4
    %570 = vrot.lane.b32.xlu0 %v569, 64
    %v571 = vpop.permute.xlu0 %570
    %v573 = vsel %vm304, %v555, %v566
    %v574 = vsel %vm304, %v560, %v571
    %v577 = vrot.slane %v573, 4
    %v578 = vrot.slane %v574, 4
    %vm581 = vcmask 1043456
    %v582 = vsel %vm581, %v486, %v577
    %v583 = vsel %vm581, %v487, %v578
    %v584 = vld [vmem:[%s4] sm:$0xff]
    %v585 = vld [vmem:[%s4 + $0x8] sm:$0xff]
    %v586 = vld [vmem:[%s4 + $0x10] sm:$0xff]
    %v587 = vld [vmem:[%s4 + $0x18] sm:$0xff]
    %v588 = vld [vmem:[%s4 + $0x20] sm:$0xff]
    %v589 = vld [vmem:[%s4 + $0x28] sm:$0xff]
    %v590 = vld [vmem:[%s4 + $0x30] sm:$0xff]
    %v591 = vld [vmem:[%s4 + $0x38] sm:$0xff]
    %v592 = vld [vmem:[%s4 + $0x40] sm:$0xff]
    %v593 = vld [vmem:[%s4 + $0x48] sm:$0xff]
    %v594 = vld [vmem:[%s4 + $0x50] sm:$0xff]
    %v595 = vld [vmem:[%s4 + $0x58] sm:$0xff]
    %v596 = vld [vmem:[%s4 + $0x60] sm:$0xff]
    %v597 = vld [vmem:[%s4 + $0x68] sm:$0xff]
    %v598 = vld [vmem:[%s4 + $0x70] sm:$0xff]
    %v599 = vld [vmem:[%s4 + $0x78] sm:$0xff]
    %v600 = vld [vmem:[%s4 + $0x80] sm:$0xff]
    %v601 = vld [vmem:[%s4 + $0x88] sm:$0xff]
    %v602 = vld [vmem:[%s4 + $0x90] sm:$0xff]
    %v603 = vld [vmem:[%s4 + $0x98] sm:$0xff]
    %v604 = vld [vmem:[%s4 + $0xa0] sm:$0xff]
    %v605 = vld [vmem:[%s4 + $0xa8] sm:$0xff]
    %v606 = vld [vmem:[%s4 + $0xb0] sm:$0xff]
    %v607 = vld [vmem:[%s4 + $0xb8] sm:$0xff]
    %v608 = vld [vmem:[%s4 + $0xc0] sm:$0xff]
    %v609 = vld [vmem:[%s4 + $0xc8] sm:$0xff]
    %v610 = vld [vmem:[%s4 + $0xd0] sm:$0xff]
    %v611 = vld [vmem:[%s4 + $0xd8] sm:$0xff]
    %v612 = vld [vmem:[%s4 + $0xe0] sm:$0xff]
    %v613 = vld [vmem:[%s4 + $0xe8] sm:$0xff]
    %v614 = vld [vmem:[%s4 + $0xf0] sm:$0xff]
    %v615 = vld [vmem:[%s4 + $0xf8] sm:$0xff]
    %616 = vmatprep.subr.mxu0 0.0
    %617 = vmatpush1.msra.mxu0 %v584
    %618 = vmatprep.subr.mxu0 0.0
    %619 = vmatpush1.msra.mxu0 %v585
    %620 = vmatprep.subr.mxu0 0.0
    %621 = vmatpush1.msra.mxu0 %v586
    %622 = vmatprep.subr.mxu0 0.0
    %623 = vmatpush1.msra.mxu0 %v587
    %624 = vmatprep.subr.mxu0 0.0
    %625 = vmatpush1.msra.mxu0 %v588
    %626 = vmatprep.subr.mxu0 0.0
    %627 = vmatpush1.msra.mxu0 %v589
    %628 = vmatprep.subr.mxu0 0.0
    %629 = vmatpush1.msra.mxu0 %v590
    %630 = vmatprep.subr.mxu0 0.0
    %631 = vmatpush1.msra.mxu0 %v591
    %632 = vmatprep.subr.mxu0 0.0
    %633 = vmatpush1.msra.mxu0 %v592
    %634 = vmatprep.subr.mxu0 0.0
    %635 = vmatpush1.msra.mxu0 %v593
    %636 = vmatprep.subr.mxu0 0.0
    %637 = vmatpush1.msra.mxu0 %v594
    %638 = vmatprep.subr.mxu0 0.0
    %639 = vmatpush1.msra.mxu0 %v595
    %640 = vmatprep.subr.mxu0 0.0
    %641 = vmatpush1.msra.mxu0 %v596
    %642 = vmatprep.subr.mxu0 0.0
    %643 = vmatpush1.msra.mxu0 %v597
    %644 = vmatprep.subr.mxu0 0.0
    %645 = vmatpush1.msra.mxu0 %v598
    %646 = vmatprep.subr.mxu0 0.0
    %647 = vmatpush1.msra.mxu0 %v599
    %648 = vmatprep.subr.mxu0 0.0
    %649 = vmatpush1.msra.mxu0 %v600
    %650 = vmatprep.subr.mxu0 0.0
    %651 = vmatpush1.msra.mxu0 %v601
    %652 = vmatprep.subr.mxu0 0.0
    %653 = vmatpush1.msra.mxu0 %v602
    %654 = vmatprep.subr.mxu0 0.0
    %655 = vmatpush1.msra.mxu0 %v603
    %656 = vmatprep.subr.mxu0 0.0
    %657 = vmatpush1.msra.mxu0 %v604
    %658 = vmatprep.subr.mxu0 0.0
    %659 = vmatpush1.msra.mxu0 %v605
    %660 = vmatprep.subr.mxu0 0.0
    %661 = vmatpush1.msra.mxu0 %v606
    %662 = vmatprep.subr.mxu0 0.0
    %663 = vmatpush1.msra.mxu0 %v607
    %664 = vmatprep.subr.mxu0 0.0
    %665 = vmatpush1.msra.mxu0 %v608
    %666 = vmatprep.subr.mxu0 0.0
    %667 = vmatpush1.msra.mxu0 %v609
    %668 = vmatprep.subr.mxu0 0.0
    %669 = vmatpush1.msra.mxu0 %v610
    %670 = vmatprep.subr.mxu0 0.0
    %671 = vmatpush1.msra.mxu0 %v611
    %672 = vmatprep.subr.mxu0 0.0
    %673 = vmatpush1.msra.mxu0 %v612
    %674 = vmatprep.subr.mxu0 0.0
    %675 = vmatpush1.msra.mxu0 %v613
    %676 = vmatprep.subr.mxu0 0.0
    %677 = vmatpush1.msra.mxu0 %v614
    %678 = vmatprep.subr.mxu0 0.0
    %679 = vmatpush1.msra.mxu0 %v615
    %680 = vmatprep.mubr.f32.mxu0 %v583
    %681 = vmatmul.mubr.f32.gmra.mrb[0].mxu0 %v582
    %v682 = vpop.f32.mrb[0].mxu0
    %v683 = vadd.f32 0.0, %v682
    %v684 = vpop.f32.mrb[0].mxu0
    %685 = vdwg.mxu0
    %687 = vrot.lane.b32.xlu0 %v683, 112
    %v688 = vpop.permute.xlu0 %687
    %v690 = vadd.f32 %v683, %v688
    %691 = vrot.lane.b32.xlu0 %v683, 96
    %v692 = vpop.permute.xlu0 %691
    %v694 = vadd.f32 %v690, %v692
    %695 = vrot.lane.b32.xlu0 %v683, 80
    %v696 = vpop.permute.xlu0 %695
    %v698 = vadd.f32 %v694, %v696
    %v699 = vsel %vm65, %v698, 0.0
    %v700 = vrot.slane %v699, 4
    %v701 = vadd.f32 %v699, %v700
    %v702 = vrot.slane %v701, 2
    %v703 = vadd.f32 %v701, %v702
    %v704 = vrot.slane %v703, 1
    %v705 = vadd.f32 %v703, %v704
    %v706 = vmul.f32 %v705, 0.03125
    %708 = vrot.lane.b32.xlu0 %v706, 16
    %v709 = vpop.permute.xlu0 %708
    %711 = vrot.lane.b32.xlu0 %v706, 32
    %v712 = vpop.permute.xlu0 %711
    %714 = vrot.lane.b32.xlu0 %v706, 48
    %v715 = vpop.permute.xlu0 %714
    %v717 = vsel %vm65, %v706, %v709
    %vm718 = vcmask 261120
    %v719 = vsel %vm718, %v717, %v712
    %v720 = vsel %vm175, %v719, %v715
    %v721 = vlaneseq
    %v722 = vshrl.u32 %v721, 7
    %v723 = vsub.s32 0, %v722
    %v724 = vrot.slane %v720, %v723
    %v725 = vsub.f32 %v683, %v724
    %v726 = vmul.f32 %v725, %v725
    %728 = vrot.lane.b32.xlu0 %v726, 112
    %v729 = vpop.permute.xlu0 %728
    %v731 = vadd.f32 %v726, %v729
    %732 = vrot.lane.b32.xlu0 %v726, 96
    %v733 = vpop.permute.xlu0 %732
    %v735 = vadd.f32 %v731, %v733
    %736 = vrot.lane.b32.xlu0 %v726, 80
    %v737 = vpop.permute.xlu0 %736
    %v739 = vadd.f32 %v735, %v737
    %v740 = vsel %vm65, %v739, 0.0
    %v741 = vrot.slane %v740, 4
    %v742 = vadd.f32 %v740, %v741
    %v743 = vrot.slane %v742, 2
    %v744 = vadd.f32 %v742, %v743
    %v745 = vrot.slane %v744, 1
    %v746 = vadd.f32 %v744, %v745
    %v747 = vmul.f32 %v746, 0.03125
    %749 = vrot.lane.b32.xlu0 %v747, 16
    %v750 = vpop.permute.xlu0 %749
    %752 = vrot.lane.b32.xlu0 %v747, 32
    %v753 = vpop.permute.xlu0 %752
    %755 = vrot.lane.b32.xlu0 %v747, 48
    %v756 = vpop.permute.xlu0 %755
    %v758 = vsel %vm65, %v747, %v750
    %v759 = vsel %vm718, %v758, %v753
    %v760 = vsel %vm175, %v759, %v756
    %v761 = vadd.f32 %v760, 1e-05
    %v762 = vrsqrt.pop %v761
    %v763 = vlaneseq
    %v764 = vshrl.u32 %v763, 7
    %v765 = vsub.s32 0, %v764
    %v766 = vrot.slane %v762, %v765
    %v767 = vmul.f32 %v725, %v766
    %v768 = vld [vmem:[%s5] sm:$0x1]
    %v770 = vlaneseq
    %v771 = vshrl.u32 %v770, 7
    %v772 = vsub.s32 0, %v771
    %v773 = vrot.slane %v768, %v772
    %v775 = vmul.f32 %v767, %v773
    %v776 = vld [vmem:[%s6] sm:$0x1]
    %v778 = vlaneseq
    %v779 = vshrl.u32 %v778, 7
    %v780 = vsub.s32 0, %v779
    %v781 = vrot.slane %v776, %v780
    %v783 = vadd.f32 %v775, %v781
    %vm784 = vcmp.ge.f32.partialorder %v783, 0.0
    %v785 = vmul.f32 %v783, 0.2
    %v786 = vsel %vm784, %v783, %v785
    %v787 = vld [vmem:[%s7] sm:$0xff]
    %vm788 = vcmask 31744
    %v790 = vsel %vm788, %v787, 0
    %v793 = vsel %vm581, %v786, 0
    %795 = vmatprep.subr.mxu0 0.0
    %796 = vmatpush1.msra.mxu0 %v793
    %797 = vmatprep.subr.mxu0 0.0
    %798 = vmatpush1.msra.mxu0 0.0
    %799 = vmatprep.subr.mxu0 0.0
    %800 = vmatpush1.msra.mxu0 0.0
    %801 = vmatprep.subr.mxu0 0.0
    %802 = vmatpush1.msra.mxu0 0.0
    %803 = vmatprep.subr.mxu0 0.0
    %804 = vmatpush1.msra.mxu0 0.0
    %805 = vmatprep.subr.mxu0 0.0
    %806 = vmatpush1.msra.mxu0 0.0
    %807 = vmatprep.subr.mxu0 0.0
    %808 = vmatpush1.msra.mxu0 0.0
    %809 = vmatprep.subr.mxu0 0.0
    %810 = vmatpush1.msra.mxu0 0.0
    %811 = vmatprep.subr.mxu0 0.0
    %812 = vmatpush1.msra.mxu0 0.0
    %813 = vmatprep.subr.mxu0 0.0
    %814 = vmatpush1.msra.mxu0 0.0
    %815 = vmatprep.subr.mxu0 0.0
    %816 = vmatpush1.msra.mxu0 0.0
    %817 = vmatprep.subr.mxu0 0.0
    %818 = vmatpush1.msra.mxu0 0.0
    %819 = vmatprep.subr.mxu0 0.0
    %820 = vmatpush1.msra.mxu0 0.0
    %821 = vmatprep.subr.mxu0 0.0
    %822 = vmatpush1.msra.mxu0 0.0
    %823 = vmatprep.subr.mxu0 0.0
    %824 = vmatpush1.msra.mxu0 0.0
    %825 = vmatprep.subr.mxu0 0.0
    %826 = vmatpush1.msra.mxu0 0.0
    %827 = vmatprep.subr.mxu0 0.0
    %828 = vmatpush1.msra.mxu0 0.0
    %829 = vmatprep.subr.mxu0 0.0
    %830 = vmatpush1.msra.mxu0 0.0
    %831 = vmatprep.subr.mxu0 0.0
    %832 = vmatpush1.msra.mxu0 0.0
    %833 = vmatprep.subr.mxu0 0.0
    %834 = vmatpush1.msra.mxu0 0.0
    %835 = vmatprep.subr.mxu0 0.0
    %836 = vmatpush1.msra.mxu0 0.0
    %837 = vmatprep.subr.mxu0 0.0
    %838 = vmatpush1.msra.mxu0 0.0
    %839 = vmatprep.subr.mxu0 0.0
    %840 = vmatpush1.msra.mxu0 0.0
    %841 = vmatprep.subr.mxu0 0.0
    %842 = vmatpush1.msra.mxu0 0.0
    %843 = vmatprep.subr.mxu0 0.0
    %844 = vmatpush1.msra.mxu0 0.0
    %845 = vmatprep.subr.mxu0 0.0
    %846 = vmatpush1.msra.mxu0 0.0
    %847 = vmatprep.subr.mxu0 0.0
    %848 = vmatpush1.msra.mxu0 0.0
    %849 = vmatprep.subr.mxu0 0.0
    %850 = vmatpush1.msra.mxu0 0.0
    %851 = vmatprep.subr.mxu0 0.0
    %852 = vmatpush1.msra.mxu0 0.0
    %853 = vmatprep.subr.mxu0 0.0
    %854 = vmatpush1.msra.mxu0 0.0
    %855 = vmatprep.subr.mxu0 0.0
    %856 = vmatpush1.msra.mxu0 0.0
    %857 = vmatprep.subr.mxu0 0.0
    %858 = vmatpush1.msra.mxu0 0.0
    %859 = vmatprep.mubr.f32.mxu0 0.0
    %860 = vmatmul.mubr.f32.gmra.mrb[0].mxu0 %v790
    %v861 = vpop.f32.mrb[0].mxu0
    %v862 = vadd.f32 0.0, %v861
    %v863 = vpop.f32.mrb[0].mxu0
    %864 = vdwg.mxu0
    %v866 = vrot.slane %v862, 2
    %867 = vrot.lane.b32.xlu0 %v866, 64
    %v868 = vpop.permute.xlu0 %867
    %v870 = vrot.slane %v862, 4
    %v872 = vrot.slane %v862, 6
    %873 = vrot.lane.b32.xlu0 %v872, 64
    %v874 = vpop.permute.xlu0 %873
    %v876 = vsel %vm304, %v862, %v868
    %v877 = vsel %vm304, %v870, %v874
    %v878 = vrot.slane %v786, 4
    %v879 = vsel %vm581, %v878, 0
    %881 = vmatprep.subr.mxu0 0.0
    %882 = vmatpush1.msra.mxu0 %v879
    %883 = vmatprep.subr.mxu0 0.0
    %884 = vmatpush1.msra.mxu0 0.0
    %885 = vmatprep.subr.mxu0 0.0
    %886 = vmatpush1.msra.mxu0 0.0
    %887 = vmatprep.subr.mxu0 0.0
    %888 = vmatpush1.msra.mxu0 0.0
    %889 = vmatprep.subr.mxu0 0.0
    %890 = vmatpush1.msra.mxu0 0.0
    %891 = vmatprep.subr.mxu0 0.0
    %892 = vmatpush1.msra.mxu0 0.0
    %893 = vmatprep.subr.mxu0 0.0
    %894 = vmatpush1.msra.mxu0 0.0
    %895 = vmatprep.subr.mxu0 0.0
    %896 = vmatpush1.msra.mxu0 0.0
    %897 = vmatprep.subr.mxu0 0.0
    %898 = vmatpush1.msra.mxu0 0.0
    %899 = vmatprep.subr.mxu0 0.0
    %900 = vmatpush1.msra.mxu0 0.0
    %901 = vmatprep.subr.mxu0 0.0
    %902 = vmatpush1.msra.mxu0 0.0
    %903 = vmatprep.subr.mxu0 0.0
    %904 = vmatpush1.msra.mxu0 0.0
    %905 = vmatprep.subr.mxu0 0.0
    %906 = vmatpush1.msra.mxu0 0.0
    %907 = vmatprep.subr.mxu0 0.0
    %908 = vmatpush1.msra.mxu0 0.0
    %909 = vmatprep.subr.mxu0 0.0
    %910 = vmatpush1.msra.mxu0 0.0
    %911 = vmatprep.subr.mxu0 0.0
    %912 = vmatpush1.msra.mxu0 0.0
    %913 = vmatprep.subr.mxu0 0.0
    %914 = vmatpush1.msra.mxu0 0.0
    %915 = vmatprep.subr.mxu0 0.0
    %916 = vmatpush1.msra.mxu0 0.0
    %917 = vmatprep.subr.mxu0 0.0
    %918 = vmatpush1.msra.mxu0 0.0
    %919 = vmatprep.subr.mxu0 0.0
    %920 = vmatpush1.msra.mxu0 0.0
    %921 = vmatprep.subr.mxu0 0.0
    %922 = vmatpush1.msra.mxu0 0.0
    %923 = vmatprep.subr.mxu0 0.0
    %924 = vmatpush1.msra.mxu0 0.0
    %925 = vmatprep.subr.mxu0 0.0
    %926 = vmatpush1.msra.mxu0 0.0
    %927 = vmatprep.subr.mxu0 0.0
    %928 = vmatpush1.msra.mxu0 0.0
    %929 = vmatprep.subr.mxu0 0.0
    %930 = vmatpush1.msra.mxu0 0.0
    %931 = vmatprep.subr.mxu0 0.0
    %932 = vmatpush1.msra.mxu0 0.0
    %933 = vmatprep.subr.mxu0 0.0
    %934 = vmatpush1.msra.mxu0 0.0
    %935 = vmatprep.subr.mxu0 0.0
    %936 = vmatpush1.msra.mxu0 0.0
    %937 = vmatprep.subr.mxu0 0.0
    %938 = vmatpush1.msra.mxu0 0.0
    %939 = vmatprep.subr.mxu0 0.0
    %940 = vmatpush1.msra.mxu0 0.0
    %941 = vmatprep.subr.mxu0 0.0
    %942 = vmatpush1.msra.mxu0 0.0
    %943 = vmatprep.subr.mxu0 0.0
    %944 = vmatpush1.msra.mxu0 0.0
    %945 = vmatprep.mubr.f32.mxu0 0.0
    %946 = vmatmul.mubr.f32.gmra.mrb[0].mxu0 %v790
    %v947 = vpop.f32.mrb[0].mxu0
    %v948 = vadd.f32 0.0, %v947
    %v949 = vpop.f32.mrb[0].mxu0
    %950 = vdwg.mxu0
    %v952 = vrot.slane %v948, 2
    %953 = vrot.lane.b32.xlu0 %v952, 64
    %v954 = vpop.permute.xlu0 %953
    %v956 = vrot.slane %v948, 4
    %v958 = vrot.slane %v948, 6
    %959 = vrot.lane.b32.xlu0 %v958, 64
    %v960 = vpop.permute.xlu0 %959
    %v962 = vsel %vm304, %v948, %v954
    %v963 = vsel %vm304, %v956, %v960
    %v966 = vrot.slane %v962, 6
    %v967 = vrot.slane %v963, 6
    %vm970 = vcmask 1041408
    %v971 = vsel %vm970, %v876, %v966
    %v972 = vsel %vm970, %v877, %v967
    %v973 = vld [vmem:[%s8] sm:$0xff]
    %v974 = vld [vmem:[%s8 + $0x8] sm:$0xff]
    %v975 = vld [vmem:[%s8 + $0x10] sm:$0xff]
    %v976 = vld [vmem:[%s8 + $0x18] sm:$0xff]
    %v977 = vld [vmem:[%s8 + $0x20] sm:$0xff]
    %v978 = vld [vmem:[%s8 + $0x28] sm:$0xff]
    %v979 = vld [vmem:[%s8 + $0x30] sm:$0xff]
    %v980 = vld [vmem:[%s8 + $0x38] sm:$0xff]
    %v981 = vld [vmem:[%s8 + $0x40] sm:$0xff]
    %v982 = vld [vmem:[%s8 + $0x48] sm:$0xff]
    %v983 = vld [vmem:[%s8 + $0x50] sm:$0xff]
    %v984 = vld [vmem:[%s8 + $0x58] sm:$0xff]
    %v985 = vld [vmem:[%s8 + $0x60] sm:$0xff]
    %v986 = vld [vmem:[%s8 + $0x68] sm:$0xff]
    %v987 = vld [vmem:[%s8 + $0x70] sm:$0xff]
    %v988 = vld [vmem:[%s8 + $0x78] sm:$0xff]
    %v989 = vld [vmem:[%s8 + $0x80] sm:$0xff]
    %v990 = vld [vmem:[%s8 + $0x88] sm:$0xff]
    %v991 = vld [vmem:[%s8 + $0x90] sm:$0xff]
    %v992 = vld [vmem:[%s8 + $0x98] sm:$0xff]
    %v993 = vld [vmem:[%s8 + $0xa0] sm:$0xff]
    %v994 = vld [vmem:[%s8 + $0xa8] sm:$0xff]
    %v995 = vld [vmem:[%s8 + $0xb0] sm:$0xff]
    %v996 = vld [vmem:[%s8 + $0xb8] sm:$0xff]
    %v997 = vld [vmem:[%s8 + $0xc0] sm:$0xff]
    %v998 = vld [vmem:[%s8 + $0xc8] sm:$0xff]
    %v999 = vld [vmem:[%s8 + $0xd0] sm:$0xff]
    %v1000 = vld [vmem:[%s8 + $0xd8] sm:$0xff]
    %v1001 = vld [vmem:[%s8 + $0xe0] sm:$0xff]
    %v1002 = vld [vmem:[%s8 + $0xe8] sm:$0xff]
    %v1003 = vld [vmem:[%s8 + $0xf0] sm:$0xff]
    %v1004 = vld [vmem:[%s8 + $0xf8] sm:$0xff]
    %1005 = vmatprep.subr.mxu0 0.0
    %1006 = vmatpush1.msra.mxu0 %v973
    %1007 = vmatprep.subr.mxu0 0.0
    %1008 = vmatpush1.msra.mxu0 %v974
    %1009 = vmatprep.subr.mxu0 0.0
    %1010 = vmatpush1.msra.mxu0 %v975
    %1011 = vmatprep.subr.mxu0 0.0
    %1012 = vmatpush1.msra.mxu0 %v976
    %1013 = vmatprep.subr.mxu0 0.0
    %1014 = vmatpush1.msra.mxu0 %v977
    %1015 = vmatprep.subr.mxu0 0.0
    %1016 = vmatpush1.msra.mxu0 %v978
    %1017 = vmatprep.subr.mxu0 0.0
    %1018 = vmatpush1.msra.mxu0 %v979
    %1019 = vmatprep.subr.mxu0 0.0
    %1020 = vmatpush1.msra.mxu0 %v980
    %1021 = vmatprep.subr.mxu0 0.0
    %1022 = vmatpush1.msra.mxu0 %v981
    %1023 = vmatprep.subr.mxu0 0.0
    %1024 = vmatpush1.msra.mxu0 %v982
    %1025 = vmatprep.subr.mxu0 0.0
    %1026 = vmatpush1.msra.mxu0 %v983
    %1027 = vmatprep.subr.mxu0 0.0
    %1028 = vmatpush1.msra.mxu0 %v984
    %1029 = vmatprep.subr.mxu0 0.0
    %1030 = vmatpush1.msra.mxu0 %v985
    %1031 = vmatprep.subr.mxu0 0.0
    %1032 = vmatpush1.msra.mxu0 %v986
    %1033 = vmatprep.subr.mxu0 0.0
    %1034 = vmatpush1.msra.mxu0 %v987
    %1035 = vmatprep.subr.mxu0 0.0
    %1036 = vmatpush1.msra.mxu0 %v988
    %1037 = vmatprep.subr.mxu0 0.0
    %1038 = vmatpush1.msra.mxu0 %v989
    %1039 = vmatprep.subr.mxu0 0.0
    %1040 = vmatpush1.msra.mxu0 %v990
    %1041 = vmatprep.subr.mxu0 0.0
    %1042 = vmatpush1.msra.mxu0 %v991
    %1043 = vmatprep.subr.mxu0 0.0
    %1044 = vmatpush1.msra.mxu0 %v992
    %1045 = vmatprep.subr.mxu0 0.0
    %1046 = vmatpush1.msra.mxu0 %v993
    %1047 = vmatprep.subr.mxu0 0.0
    %1048 = vmatpush1.msra.mxu0 %v994
    %1049 = vmatprep.subr.mxu0 0.0
    %1050 = vmatpush1.msra.mxu0 %v995
    %1051 = vmatprep.subr.mxu0 0.0
    %1052 = vmatpush1.msra.mxu0 %v996
    %1053 = vmatprep.subr.mxu0 0.0
    %1054 = vmatpush1.msra.mxu0 %v997
    %1055 = vmatprep.subr.mxu0 0.0
    %1056 = vmatpush1.msra.mxu0 %v998
    %1057 = vmatprep.subr.mxu0 0.0
    %1058 = vmatpush1.msra.mxu0 %v999
    %1059 = vmatprep.subr.mxu0 0.0
    %1060 = vmatpush1.msra.mxu0 %v1000
    %1061 = vmatprep.subr.mxu0 0.0
    %1062 = vmatpush1.msra.mxu0 %v1001
    %1063 = vmatprep.subr.mxu0 0.0
    %1064 = vmatpush1.msra.mxu0 %v1002
    %1065 = vmatprep.subr.mxu0 0.0
    %1066 = vmatpush1.msra.mxu0 %v1003
    %1067 = vmatprep.subr.mxu0 0.0
    %1068 = vmatpush1.msra.mxu0 %v1004
    %1069 = vmatprep.mubr.f32.mxu0 %v972
    %1070 = vmatmul.mubr.f32.gmra.mrb[0].mxu0 %v971
    %v1071 = vpop.f32.mrb[0].mxu0
    %v1072 = vadd.f32 0.0, %v1071
    %v1073 = vpop.f32.mrb[0].mxu0
    %1074 = vdwg.mxu0
    %1076 = vrot.lane.b32.xlu0 %v1072, 96
    %v1077 = vpop.permute.xlu0 %1076
    %v1079 = vadd.f32 %v1072, %v1077
    %vm1080 = vcmask 257024
    %v1081 = vsel %vm1080, %v1079, 0.0
    %v1082 = vrot.slane %v1081, 4
    %v1083 = vadd.f32 %v1081, %v1082
    %v1084 = vrot.slane %v1083, 2
    %v1085 = vadd.f32 %v1083, %v1084
    %v1086 = vrot.slane %v1085, 1
    %v1087 = vadd.f32 %v1085, %v1086
    %v1088 = vmul.f32 %v1087, 0.125
    %1090 = vrot.lane.b32.xlu0 %v1088, 32
    %v1091 = vpop.permute.xlu0 %1090
    %v1093 = vsel %vm718, %v1088, %v1091
    %v1094 = vlaneseq
    %v1095 = vshrl.u32 %v1094, 7
    %v1096 = vsub.s32 0, %v1095
    %v1097 = vrot.slane %v1093, %v1096
    %v1098 = vsub.f32 %v1072, %v1097
    %v1099 = vmul.f32 %v1098, %v1098
    %1101 = vrot.lane.b32.xlu0 %v1099, 96
    %v1102 = vpop.permute.xlu0 %1101
    %v1104 = vadd.f32 %v1099, %v1102
    %v1105 = vsel %vm1080, %v1104, 0.0
    %v1106 = vrot.slane %v1105, 4
    %v1107 = vadd.f32 %v1105, %v1106
    %v1108 = vrot.slane %v1107, 2
    %v1109 = vadd.f32 %v1107, %v1108
    %v1110 = vrot.slane %v1109, 1
    %v1111 = vadd.f32 %v1109, %v1110
    %v1112 = vmul.f32 %v1111, 0.125
    %1114 = vrot.lane.b32.xlu0 %v1112, 32
    %v1115 = vpop.permute.xlu0 %1114
    %v1117 = vsel %vm718, %v1112, %v1115
    %v1118 = vadd.f32 %v1117, 1e-05
    %v1119 = vrsqrt.pop %v1118
    %v1120 = vlaneseq
    %v1121 = vshrl.u32 %v1120, 7
    %v1122 = vsub.s32 0, %v1121
    %v1123 = vrot.slane %v1119, %v1122
    %v1124 = vmul.f32 %v1098, %v1123
    %v1125 = vld [vmem:[%s9] sm:$0x1]
    %v1127 = vlaneseq
    %v1128 = vshrl.u32 %v1127, 7
    %v1129 = vsub.s32 0, %v1128
    %v1130 = vrot.slane %v1125, %v1129
    %v1132 = vmul.f32 %v1124, %v1130
    %v1133 = vld [vmem:[%s10] sm:$0x1]
    %v1135 = vlaneseq
    %v1136 = vshrl.u32 %v1135, 7
    %v1137 = vsub.s32 0, %v1136
    %v1138 = vrot.slane %v1133, %v1137
    %v1140 = vadd.f32 %v1132, %v1138
    %vm1141 = vcmp.ge.f32.partialorder %v1140, 0.0
    %v1142 = vmul.f32 %v1140, 0.2
    %v1143 = vsel %vm1141, %v1140, %v1142
    %v1144 = vld [vmem:[%s11] sm:$0xf]
    %vm1145 = vcmask 15360
    %v1147 = vsel %vm1145, %v1144, 0
    %v1150 = vsel %vm970, %v1143, 0
    %1152 = vmatprep.subr.mxu0 0.0
    %1153 = vmatpush1.msra.mxu0 %v1150
    %1154 = vmatprep.subr.mxu0 0.0
    %1155 = vmatpush1.msra.mxu0 0.0
    %1156 = vmatprep.subr.mxu0 0.0
    %1157 = vmatpush1.msra.mxu0 0.0
    %1158 = vmatprep.subr.mxu0 0.0
    %1159 = vmatpush1.msra.mxu0 0.0
    %1160 = vmatprep.subr.mxu0 0.0
    %1161 = vmatpush1.msra.mxu0 0.0
    %1162 = vmatprep.subr.mxu0 0.0
    %1163 = vmatpush1.msra.mxu0 0.0
    %1164 = vmatprep.subr.mxu0 0.0
    %1165 = vmatpush1.msra.mxu0 0.0
    %1166 = vmatprep.subr.mxu0 0.0
    %1167 = vmatpush1.msra.mxu0 0.0
    %1168 = vmatprep.subr.mxu0 0.0
    %1169 = vmatpush1.msra.mxu0 0.0
    %1170 = vmatprep.subr.mxu0 0.0
    %1171 = vmatpush1.msra.mxu0 0.0
    %1172 = vmatprep.subr.mxu0 0.0
    %1173 = vmatpush1.msra.mxu0 0.0
    %1174 = vmatprep.subr.mxu0 0.0
    %1175 = vmatpush1.msra.mxu0 0.0
    %1176 = vmatprep.subr.mxu0 0.0
    %1177 = vmatpush1.msra.mxu0 0.0
    %1178 = vmatprep.subr.mxu0 0.0
    %1179 = vmatpush1.msra.mxu0 0.0
    %1180 = vmatprep.subr.mxu0 0.0
    %1181 = vmatpush1.msra.mxu0 0.0
    %1182 = vmatprep.subr.mxu0 0.0
    %1183 = vmatpush1.msra.mxu0 0.0
    %1184 = vmatprep.subr.mxu0 0.0
    %1185 = vmatpush1.msra.mxu0 0.0
    %1186 = vmatprep.subr.mxu0 0.0
    %1187 = vmatpush1.msra.mxu0 0.0
    %1188 = vmatprep.subr.mxu0 0.0
    %1189 = vmatpush1.msra.mxu0 0.0
    %1190 = vmatprep.subr.mxu0 0.0
    %1191 = vmatpush1.msra.mxu0 0.0
    %1192 = vmatprep.subr.mxu0 0.0
    %1193 = vmatpush1.msra.mxu0 0.0
    %1194 = vmatprep.subr.mxu0 0.0
    %1195 = vmatpush1.msra.mxu0 0.0
    %1196 = vmatprep.subr.mxu0 0.0
    %1197 = vmatpush1.msra.mxu0 0.0
    %1198 = vmatprep.subr.mxu0 0.0
    %1199 = vmatpush1.msra.mxu0 0.0
    %1200 = vmatprep.subr.mxu0 0.0
    %1201 = vmatpush1.msra.mxu0 0.0
    %1202 = vmatprep.subr.mxu0 0.0
    %1203 = vmatpush1.msra.mxu0 0.0
    %1204 = vmatprep.subr.mxu0 0.0
    %1205 = vmatpush1.msra.mxu0 0.0
    %1206 = vmatprep.subr.mxu0 0.0
    %1207 = vmatpush1.msra.mxu0 0.0
    %1208 = vmatprep.subr.mxu0 0.0
    %1209 = vmatpush1.msra.mxu0 0.0
    %1210 = vmatprep.subr.mxu0 0.0
    %1211 = vmatpush1.msra.mxu0 0.0
    %1212 = vmatprep.subr.mxu0 0.0
    %1213 = vmatpush1.msra.mxu0 0.0
    %1214 = vmatprep.subr.mxu0 0.0
    %1215 = vmatpush1.msra.mxu0 0.0
    %1216 = vmatprep.mubr.f32.mxu0 0.0
    %1217 = vmatmul.mubr.f32.gmra.mrb[0].mxu0 %v1147
    %v1218 = vpop.f32.mrb[0].mxu0
    %v1219 = vadd.f32 0.0, %v1218
    %v1220 = vpop.f32.mrb[0].mxu0
    %1221 = vdwg.mxu0
    %v1223 = vrot.slane %v1219, 1
    %1224 = vrot.lane.b32.xlu0 %v1223, 64
    %v1225 = vpop.permute.xlu0 %1224
    %v1227 = vrot.slane %v1219, 2
    %v1229 = vrot.slane %v1219, 3
    %1230 = vrot.lane.b32.xlu0 %v1229, 64
    %v1231 = vpop.permute.xlu0 %1230
    %v1233 = vsel %vm304, %v1219, %v1225
    %v1234 = vsel %vm304, %v1227, %v1231
    %v1235 = vrot.slane %v1143, 2
    %v1236 = vsel %vm970, %v1235, 0
    %1238 = vmatprep.subr.mxu0 0.0
    %1239 = vmatpush1.msra.mxu0 %v1236
    %1240 = vmatprep.subr.mxu0 0.0
    %1241 = vmatpush1.msra.mxu0 0.0
    %1242 = vmatprep.subr.mxu0 0.0
    %1243 = vmatpush1.msra.mxu0 0.0
    %1244 = vmatprep.subr.mxu0 0.0
    %1245 = vmatpush1.msra.mxu0 0.0
    %1246 = vmatprep.subr.mxu0 0.0
    %1247 = vmatpush1.msra.mxu0 0.0
    %1248 = vmatprep.subr.mxu0 0.0
    %1249 = vmatpush1.msra.mxu0 0.0
    %1250 = vmatprep.subr.mxu0 0.0
    %1251 = vmatpush1.msra.mxu0 0.0
    %1252 = vmatprep.subr.mxu0 0.0
    %1253 = vmatpush1.msra.mxu0 0.0
    %1254 = vmatprep.subr.mxu0 0.0
    %1255 = vmatpush1.msra.mxu0 0.0
    %1256 = vmatprep.subr.mxu0 0.0
    %1257 = vmatpush1.msra.mxu0 0.0
    %1258 = vmatprep.subr.mxu0 0.0
    %1259 = vmatpush1.msra.mxu0 0.0
    %1260 = vmatprep.subr.mxu0 0.0
    %1261 = vmatpush1.msra.mxu0 0.0
    %1262 = vmatprep.subr.mxu0 0.0
    %1263 = vmatpush1.msra.mxu0 0.0
    %1264 = vmatprep.subr.mxu0 0.0
    %1265 = vmatpush1.msra.mxu0 0.0
    %1266 = vmatprep.subr.mxu0 0.0
    %1267 = vmatpush1.msra.mxu0 0.0
    %1268 = vmatprep.subr.mxu0 0.0
    %1269 = vmatpush1.msra.mxu0 0.0
    %1270 = vmatprep.subr.mxu0 0.0
    %1271 = vmatpush1.msra.mxu0 0.0
    %1272 = vmatprep.subr.mxu0 0.0
    %1273 = vmatpush1.msra.mxu0 0.0
    %1274 = vmatprep.subr.mxu0 0.0
    %1275 = vmatpush1.msra.mxu0 0.0
    %1276 = vmatprep.subr.mxu0 0.0
    %1277 = vmatpush1.msra.mxu0 0.0
    %1278 = vmatprep.subr.mxu0 0.0
    %1279 = vmatpush1.msra.mxu0 0.0
    %1280 = vmatprep.subr.mxu0 0.0
    %1281 = vmatpush1.msra.mxu0 0.0
    %1282 = vmatprep.subr.mxu0 0.0
    %1283 = vmatpush1.msra.mxu0 0.0
    %1284 = vmatprep.subr.mxu0 0.0
    %1285 = vmatpush1.msra.mxu0 0.0
    %1286 = vmatprep.subr.mxu0 0.0
    %1287 = vmatpush1.msra.mxu0 0.0
    %1288 = vmatprep.subr.mxu0 0.0
    %1289 = vmatpush1.msra.mxu0 0.0
    %1290 = vmatprep.subr.mxu0 0.0
    %1291 = vmatpush1.msra.mxu0 0.0
    %1292 = vmatprep.subr.mxu0 0.0
    %1293 = vmatpush1.msra.mxu0 0.0
    %1294 = vmatprep.subr.mxu0 0.0
    %1295 = vmatpush1.msra.mxu0 0.0
    %1296 = vmatprep.subr.mxu0 0.0
    %1297 = vmatpush1.msra.mxu0 0.0
    %1298 = vmatprep.subr.mxu0 0.0
    %1299 = vmatpush1.msra.mxu0 0.0
    %1300 = vmatprep.subr.mxu0 0.0
    %1301 = vmatpush1.msra.mxu0 0.0
    %1302 = vmatprep.mubr.f32.mxu0 0.0
    %1303 = vmatmul.mubr.f32.gmra.mrb[0].mxu0 %v1147
    %v1304 = vpop.f32.mrb[0].mxu0
    %v1305 = vadd.f32 0.0, %v1304
    %v1306 = vpop.f32.mrb[0].mxu0
    %1307 = vdwg.mxu0
    %v1309 = vrot.slane %v1305, 1
    %1310 = vrot.lane.b32.xlu0 %v1309, 64
    %v1311 = vpop.permute.xlu0 %1310
    %v1313 = vrot.slane %v1305, 2
    %v1315 = vrot.slane %v1305, 3
    %1316 = vrot.lane.b32.xlu0 %v1315, 64
    %v1317 = vpop.permute.xlu0 %1316
    %v1319 = vsel %vm304, %v1305, %v1311
    %v1320 = vsel %vm304, %v1313, %v1317
    %v1323 = vrot.slane %v1319, 7
    %v1324 = vrot.slane %v1320, 7
    %vm1327 = vcmask 1040384
    %v1328 = vsel %vm1327, %v1233, %v1323
    %v1329 = vsel %vm1327, %v1234, %v1324
    %v1330 = vld [vmem:[%s12] sm:$0xff]
    %v1331 = vld [vmem:[%s12 + $0x8] sm:$0xff]
    %v1332 = vld [vmem:[%s12 + $0x10] sm:$0xff]
    %v1333 = vld [vmem:[%s12 + $0x18] sm:$0xff]
    %v1334 = vld [vmem:[%s12 + $0x20] sm:$0xff]
    %v1335 = vld [vmem:[%s12 + $0x28] sm:$0xff]
    %v1336 = vld [vmem:[%s12 + $0x30] sm:$0xff]
    %v1337 = vld [vmem:[%s12 + $0x38] sm:$0xff]
    %v1338 = vld [vmem:[%s12 + $0x40] sm:$0xff]
    %v1339 = vld [vmem:[%s12 + $0x48] sm:$0xff]
    %v1340 = vld [vmem:[%s12 + $0x50] sm:$0xff]
    %v1341 = vld [vmem:[%s12 + $0x58] sm:$0xff]
    %v1342 = vld [vmem:[%s12 + $0x60] sm:$0xff]
    %v1343 = vld [vmem:[%s12 + $0x68] sm:$0xff]
    %v1344 = vld [vmem:[%s12 + $0x70] sm:$0xff]
    %v1345 = vld [vmem:[%s12 + $0x78] sm:$0xff]
    %v1346 = vld [vmem:[%s12 + $0x80] sm:$0xff]
    %v1347 = vld [vmem:[%s12 + $0x88] sm:$0xff]
    %v1348 = vld [vmem:[%s12 + $0x90] sm:$0xff]
    %v1349 = vld [vmem:[%s12 + $0x98] sm:$0xff]
    %v1350 = vld [vmem:[%s12 + $0xa0] sm:$0xff]
    %v1351 = vld [vmem:[%s12 + $0xa8] sm:$0xff]
    %v1352 = vld [vmem:[%s12 + $0xb0] sm:$0xff]
    %v1353 = vld [vmem:[%s12 + $0xb8] sm:$0xff]
    %v1354 = vld [vmem:[%s12 + $0xc0] sm:$0xff]
    %v1355 = vld [vmem:[%s12 + $0xc8] sm:$0xff]
    %v1356 = vld [vmem:[%s12 + $0xd0] sm:$0xff]
    %v1357 = vld [vmem:[%s12 + $0xd8] sm:$0xff]
    %v1358 = vld [vmem:[%s12 + $0xe0] sm:$0xff]
    %v1359 = vld [vmem:[%s12 + $0xe8] sm:$0xff]
    %v1360 = vld [vmem:[%s12 + $0xf0] sm:$0xff]
    %v1361 = vld [vmem:[%s12 + $0xf8] sm:$0xff]
    %1362 = vmatprep.subr.mxu0 0.0
    %1363 = vmatpush1.msra.mxu0 %v1330
    %1364 = vmatprep.subr.mxu0 0.0
    %1365 = vmatpush1.msra.mxu0 %v1331
    %1366 = vmatprep.subr.mxu0 0.0
    %1367 = vmatpush1.msra.mxu0 %v1332
    %1368 = vmatprep.subr.mxu0 0.0
    %1369 = vmatpush1.msra.mxu0 %v1333
    %1370 = vmatprep.subr.mxu0 0.0
    %1371 = vmatpush1.msra.mxu0 %v1334
    %1372 = vmatprep.subr.mxu0 0.0
    %1373 = vmatpush1.msra.mxu0 %v1335
    %1374 = vmatprep.subr.mxu0 0.0
    %1375 = vmatpush1.msra.mxu0 %v1336
    %1376 = vmatprep.subr.mxu0 0.0
    %1377 = vmatpush1.msra.mxu0 %v1337
    %1378 = vmatprep.subr.mxu0 0.0
    %1379 = vmatpush1.msra.mxu0 %v1338
    %1380 = vmatprep.subr.mxu0 0.0
    %1381 = vmatpush1.msra.mxu0 %v1339
    %1382 = vmatprep.subr.mxu0 0.0
    %1383 = vmatpush1.msra.mxu0 %v1340
    %1384 = vmatprep.subr.mxu0 0.0
    %1385 = vmatpush1.msra.mxu0 %v1341
    %1386 = vmatprep.subr.mxu0 0.0
    %1387 = vmatpush1.msra.mxu0 %v1342
    %1388 = vmatprep.subr.mxu0 0.0
    %1389 = vmatpush1.msra.mxu0 %v1343
    %1390 = vmatprep.subr.mxu0 0.0
    %1391 = vmatpush1.msra.mxu0 %v1344
    %1392 = vmatprep.subr.mxu0 0.0
    %1393 = vmatpush1.msra.mxu0 %v1345
    %1394 = vmatprep.subr.mxu0 0.0
    %1395 = vmatpush1.msra.mxu0 %v1346
    %1396 = vmatprep.subr.mxu0 0.0
    %1397 = vmatpush1.msra.mxu0 %v1347
    %1398 = vmatprep.subr.mxu0 0.0
    %1399 = vmatpush1.msra.mxu0 %v1348
    %1400 = vmatprep.subr.mxu0 0.0
    %1401 = vmatpush1.msra.mxu0 %v1349
    %1402 = vmatprep.subr.mxu0 0.0
    %1403 = vmatpush1.msra.mxu0 %v1350
    %1404 = vmatprep.subr.mxu0 0.0
    %1405 = vmatpush1.msra.mxu0 %v1351
    %1406 = vmatprep.subr.mxu0 0.0
    %1407 = vmatpush1.msra.mxu0 %v1352
    %1408 = vmatprep.subr.mxu0 0.0
    %1409 = vmatpush1.msra.mxu0 %v1353
    %1410 = vmatprep.subr.mxu0 0.0
    %1411 = vmatpush1.msra.mxu0 %v1354
    %1412 = vmatprep.subr.mxu0 0.0
    %1413 = vmatpush1.msra.mxu0 %v1355
    %1414 = vmatprep.subr.mxu0 0.0
    %1415 = vmatpush1.msra.mxu0 %v1356
    %1416 = vmatprep.subr.mxu0 0.0
    %1417 = vmatpush1.msra.mxu0 %v1357
    %1418 = vmatprep.subr.mxu0 0.0
    %1419 = vmatpush1.msra.mxu0 %v1358
    %1420 = vmatprep.subr.mxu0 0.0
    %1421 = vmatpush1.msra.mxu0 %v1359
    %1422 = vmatprep.subr.mxu0 0.0
    %1423 = vmatpush1.msra.mxu0 %v1360
    %1424 = vmatprep.subr.mxu0 0.0
    %1425 = vmatpush1.msra.mxu0 %v1361
    %1426 = vmatprep.mubr.f32.mxu0 %v1329
    %1427 = vmatmul.mubr.f32.gmra.mrb[0].mxu0 %v1328
    %v1428 = vpop.f32.mrb[0].mxu0
    %v1429 = vadd.f32 0.0, %v1428
    %v1430 = vpop.f32.mrb[0].mxu0
    %1431 = vdwg.mxu0
    %vm1432 = vcmask 517120
    %v1433 = vsel %vm1432, %v1429, 0.0
    %v1434 = vrot.slane %v1433, 4
    %v1435 = vadd.f32 %v1433, %v1434
    %v1436 = vrot.slane %v1435, 2
    %v1437 = vadd.f32 %v1435, %v1436
    %v1438 = vrot.slane %v1437, 1
    %v1439 = vadd.f32 %v1437, %v1438
    %v1440 = vmul.f32 %v1439, 0.5
    %v1441 = vsub.f32 %v1429, %v1440
    %v1442 = vmul.f32 %v1441, %v1441
    %v1443 = vsel %vm1432, %v1442, 0.0
    %v1444 = vrot.slane %v1443, 4
    %v1445 = vadd.f32 %v1443, %v1444
    %v1446 = vrot.slane %v1445, 2
    %v1447 = vadd.f32 %v1445, %v1446
    %v1448 = vrot.slane %v1447, 1
    %v1449 = vadd.f32 %v1447, %v1448
    %v1450 = vmul.f32 %v1449, 0.5
    %v1451 = vadd.f32 %v1450, 1e-05
    %v1452 = vrsqrt.pop %v1451
    %v1453 = vmul.f32 %v1441, %v1452
    %v1454 = vld [vmem:[%s13] sm:$0x1]
    %v1456 = vlaneseq
    %v1457 = vshrl.u32 %v1456, 7
    %v1458 = vsub.s32 0, %v1457
    %v1459 = vrot.slane %v1454, %v1458
    %v1461 = vmul.f32 %v1453, %v1459
    %v1462 = vld [vmem:[%s14] sm:$0x1]
    %v1464 = vlaneseq
    %v1465 = vshrl.u32 %v1464, 7
    %v1466 = vsub.s32 0, %v1465
    %v1467 = vrot.slane %v1462, %v1466
    %v1469 = vadd.f32 %v1461, %v1467
    %vm1470 = vcmp.ge.f32.partialorder %v1469, 0.0
    %v1471 = vmul.f32 %v1469, 0.2
    %v1472 = vsel %vm1470, %v1469, %v1471
    %v1473 = vld [vmem:[%s15] sm:$0xff]
    %v1474 = vld [vmem:[%s15 + $0x8] sm:$0xff]
    %v1475 = vld [vmem:[%s15 + $0x10] sm:$0xff]
    %v1476 = vld [vmem:[%s15 + $0x18] sm:$0xff]
    %v1477 = vld [vmem:[%s15 + $0x20] sm:$0xff]
    %v1478 = vld [vmem:[%s15 + $0x28] sm:$0xff]
    %v1479 = vld [vmem:[%s15 + $0x30] sm:$0xff]
    %v1480 = vld [vmem:[%s15 + $0x38] sm:$0xff]
    %v1481 = vld [vmem:[%s16] sm:$0x1]
    %v1483 = vlaneseq
    %v1484 = vshrl.u32 %v1483, 7
    %v1485 = vsub.s32 0, %v1484
    %v1486 = vrot.slane %v1481, %v1485
    %v1489 = vsel %vm304, %v1472, 0
    %1491 = vmatprep.subr.mxu0 0.0
    %1492 = vmatpush1.msra.mxu0 %v1473
    %1493 = vmatprep.subr.mxu0 0.0
    %1494 = vmatpush1.msra.mxu0 %v1474
    %1495 = vmatprep.subr.mxu0 0.0
    %1496 = vmatpush1.msra.mxu0 %v1475
    %1497 = vmatprep.subr.mxu0 0.0
    %1498 = vmatpush1.msra.mxu0 %v1476
    %1499 = vmatprep.subr.mxu0 0.0
    %1500 = vmatpush1.msra.mxu0 %v1477
    %1501 = vmatprep.subr.mxu0 0.0
    %1502 = vmatpush1.msra.mxu0 %v1478
    %1503 = vmatprep.subr.mxu0 0.0
    %1504 = vmatpush1.msra.mxu0 %v1479
    %1505 = vmatprep.subr.mxu0 0.0
    %1506 = vmatpush1.msra.mxu0 %v1480
    %1507 = vmatprep.subr.mxu0 0.0
    %1508 = vmatpush1.msra.mxu0 0.0
    %1509 = vmatprep.subr.mxu0 0.0
    %1510 = vmatpush1.msra.mxu0 0.0
    %1511 = vmatprep.subr.mxu0 0.0
    %1512 = vmatpush1.msra.mxu0 0.0
    %1513 = vmatprep.subr.mxu0 0.0
    %1514 = vmatpush1.msra.mxu0 0.0
    %1515 = vmatprep.subr.mxu0 0.0
    %1516 = vmatpush1.msra.mxu0 0.0
    %1517 = vmatprep.subr.mxu0 0.0
    %1518 = vmatpush1.msra.mxu0 0.0
    %1519 = vmatprep.subr.mxu0 0.0
    %1520 = vmatpush1.msra.mxu0 0.0
    %1521 = vmatprep.subr.mxu0 0.0
    %1522 = vmatpush1.msra.mxu0 0.0
    %1523 = vmatprep.subr.mxu0 0.0
    %1524 = vmatpush1.msra.mxu0 0.0
    %1525 = vmatprep.subr.mxu0 0.0
    %1526 = vmatpush1.msra.mxu0 0.0
    %1527 = vmatprep.subr.mxu0 0.0
    %1528 = vmatpush1.msra.mxu0 0.0
    %1529 = vmatprep.subr.mxu0 0.0
    %1530 = vmatpush1.msra.mxu0 0.0
    %1531 = vmatprep.subr.mxu0 0.0
    %1532 = vmatpush1.msra.mxu0 0.0
    %1533 = vmatprep.subr.mxu0 0.0
    %1534 = vmatpush1.msra.mxu0 0.0
    %1535 = vmatprep.subr.mxu0 0.0
    %1536 = vmatpush1.msra.mxu0 0.0
    %1537 = vmatprep.subr.mxu0 0.0
    %1538 = vmatpush1.msra.mxu0 0.0
    %1539 = vmatprep.subr.mxu0 0.0
    %1540 = vmatpush1.msra.mxu0 0.0
    %1541 = vmatprep.subr.mxu0 0.0
    %1542 = vmatpush1.msra.mxu0 0.0
    %1543 = vmatprep.subr.mxu0 0.0
    %1544 = vmatpush1.msra.mxu0 0.0
    %1545 = vmatprep.subr.mxu0 0.0
    %1546 = vmatpush1.msra.mxu0 0.0
    %1547 = vmatprep.subr.mxu0 0.0
    %1548 = vmatpush1.msra.mxu0 0.0
    %1549 = vmatprep.subr.mxu0 0.0
    %1550 = vmatpush1.msra.mxu0 0.0
    %1551 = vmatprep.subr.mxu0 0.0
    %1552 = vmatpush1.msra.mxu0 0.0
    %1553 = vmatprep.subr.mxu0 0.0
    %1554 = vmatpush1.msra.mxu0 0.0
    %1555 = vmatprep.mubr.f32.mxu0 0.0
    %1556 = vmatmul.mubr.f32.gmra.mrb[0].mxu0 %v1489
    %v1557 = vpop.f32.mrb[0].mxu0
    %v1558 = vadd.f32 %v1486, %v1557
    %v1559 = vpop.f32.mrb[0].mxu0
    %1560 = vdwg.mxu0
    %vm1561 = vcmask 123904
    %1562 = vst.msk [vmem:[#allocation2] sm:$0x3] %vm1561, %v1558
    // Predicated region
    $region70: #{encoder_forward.1} parent=1 // pred_check
      _
    $region71: #{encoder_forward.1} parent=1 // pred_check_branch
      %1564 = sbr.rel (0) target = $region73
    $region72: #{encoder_forward.1} parent=1 // pred_region
      %s1566 = ssub.s32 32, 32
      %1567 = vsyncadd [#allocation3], %s1566
      %s1569 = sshll.u32 [#allocation2], 4
      %s1570 = int_to_ptr.vmem [resolvable:$true] %s1569
      %1572 = dma.vmem_to_hbm [thread:$0]  %s1570, 32, %s17, [#allocation3]
    $region73: #{encoder_forward.1} parent=1 // pred_fallthru
      _
    // Predicated region
    $region74: #{encoder_forward.1} parent=1 // pred_check
      _
    $region75: #{encoder_forward.1} parent=1 // pred_check_branch
      %1574 = sbr.rel (0) target = $region77
    $region76: #{encoder_forward.1} parent=1 // pred_region
      %1575 = dma.done [#allocation3], 32
    $region77: #{encoder_forward.1} parent=1 // pred_fallthru
      _
    %1576 = vsyncpa [#allocation3], 1

</llo_original>
